<compile_context>
chip_gen: v7x
topology: tpu7x:2x2x1
jax: 0.10.0
libtpu: 0.0.40
codegen_flags: <defaults>
</compile_context>

<pallas_src>
import functools

import jax
import jax.numpy as jnp
from jax.experimental import pallas as pl
from jax.experimental.pallas import tpu as pltpu


def _row_losses(logits, log_w, tgt):
    """Per-row loss = logsumexp_j(log_w + logits) - logits[target].

    All reductions are row-local, so garbage in padded tail rows stays
    confined to those rows and is masked by the caller.
    """
    tr, c = logits.shape
    lower = log_w + logits                                   # (tr, c)
    m = jnp.max(lower, axis=-1, keepdims=True)
    lse = m + jnp.log(jnp.sum(jnp.exp(lower - m), axis=-1, keepdims=True))

    # logits[i, target[i]] via one-hot select along lanes (vector gather).
    col = jax.lax.broadcasted_iota(jnp.int32, (tr, c), 1)
    picked = jnp.sum(jnp.where(col == tgt, logits, 0.0), axis=-1, keepdims=True)
    return lse - picked                                      # (tr, 1)


def _wce_kernel(logits_ref, factor_ref, target_ref, out_ref, acc_ref,
                *, n, block_rows, factor_is_log):
    i = pl.program_id(0)

    @pl.when(i == 0)
    def _():
        acc_ref[...] = jnp.zeros_like(acc_ref)

    logits = logits_ref[...].astype(jnp.float32)             # (tr, C)
    factor = factor_ref[...].astype(jnp.float32)             # (tr, C) or (1, C)
    log_w = factor if factor_is_log else jnp.log(factor)
    tgt = target_ref[...]                                    # (tr, 1) int32

    per_row = _row_losses(logits, log_w, tgt)                # (tr, 1)

    # Mask the padded tail rows of the (only possibly partial) last block.
    rows = i * block_rows + jax.lax.broadcasted_iota(
        jnp.int32, per_row.shape, 0)
    per_row = jnp.where(rows < n, per_row, 0.0)

    # Scalar accumulate: sublane reduce on the XLU, one vreg RMW.
    acc_ref[...] += jnp.sum(per_row, keepdims=True)

    @pl.when(i == pl.num_programs(0) - 1)
    def _():
        out_ref[...] = acc_ref[...] * jnp.float32(1.0 / n)   # mean folded in


def _ce_kernel(logits_ref, target_ref, out_ref, acc_ref, *, n, block_rows):
    """factor=None fast path: plain (unweighted) cross-entropy."""
    i = pl.program_id(0)

    @pl.when(i == 0)
    def _():
        acc_ref[...] = jnp.zeros_like(acc_ref)

    logits = logits_ref[...].astype(jnp.float32)
    per_row = _row_losses(logits, jnp.float32(0.0), target_ref[...])

    rows = i * block_rows + jax.lax.broadcasted_iota(
        jnp.int32, per_row.shape, 0)
    per_row = jnp.where(rows < n, per_row, 0.0)

    acc_ref[...] += jnp.sum(per_row, keepdims=True)

    @pl.when(i == pl.num_programs(0) - 1)
    def _():
        out_ref[...] = acc_ref[...] * jnp.float32(1.0 / n)


def my_cross_entropy_loss(logits, target, factor=None, *, block_rows=None,
                          vmem_budget_bytes=8 * 1024 * 1024):
    """Pallas implementation of MyCrossEntropyLoss.forward.

    Args:
      logits: [N, C] float (f32 or bf16) scores.
      target: [N] integer class indices.
      factor: [N, C], [1, C], [C] positive weights, or None (plain CE).
      block_rows: optional row-tile override (rounded to a multiple of 32).
      vmem_budget_bytes: cap on double-buffered streamed VMEM (v7x-safe).

    Returns:
      scalar f32 loss = -mean_i log_weighted_softmax(logits, factor)[i, target[i]]
    """
    logits = jnp.asarray(logits)
    target = jnp.asarray(target, jnp.int32)

    n, c = logits.shape
    if n == 0:
        # torch .mean() over an empty batch yields NaN.
        return jnp.float32(jnp.nan)

    has_factor = factor is not None
    factor_full = False
    factor_is_log = False
    if has_factor:
        factor = jnp.asarray(factor)
        if factor.ndim == 1:
            factor = factor.reshape(1, c)
        factor_full = factor.shape[0] != 1
        if not factor_full:
            # Broadcast weights: hoist the log out of the per-step body.
            factor = jnp.log(factor.astype(jnp.float32))
            factor_is_log = True

    # --- row-tile selection (VMEM-budgeted, collapses to 1 block when small) --
    sub = 32                                   # sublane multiple, dtype-safe
    n_pad = -(-n // sub) * sub
    c_pad = -(-c // 128) * 128
    per_row_bytes = c_pad * jnp.dtype(logits.dtype).itemsize        # logits
    if has_factor and factor_full:
        per_row_bytes += c_pad * jnp.dtype(factor.dtype).itemsize   # factor
    per_row_bytes += 128 * 4                                        # target
    tr_budget = max(sub, (vmem_budget_bytes // (2 * per_row_bytes)) // sub * sub)
    tr = tr_budget if block_rows is None else max(sub, (int(block_rows) // sub) * sub)
    tr = min(tr, n_pad)
    num_blocks = -(-n // tr)

    row_spec = pl.BlockSpec((tr, c), lambda i: (i, 0))
    tgt_spec = pl.BlockSpec((tr, 1), lambda i: (i, 0))
    out_spec = pl.BlockSpec((1, 1), lambda i: (0, 0))      # resident scalar acc

    common = dict(
        out_shape=jax.ShapeDtypeStruct((1, 1), jnp.float32),
        compiler_params=pltpu.CompilerParams(
            dimension_semantics=("arbitrary",)),
    )

    if has_factor:
        if factor_full:
            factor_spec = pl.BlockSpec((tr, c), lambda i: (i, 0))
        else:
            factor_spec = pl.BlockSpec((1, c), lambda i: (0, 0))
        kernel = functools.partial(
            _wce_kernel, n=n, block_rows=tr, factor_is_log=factor_is_log)
        out = pl.pallas_call(
            kernel,
            grid_spec=pltpu.PrefetchScalarGridSpec(
                num_scalar_prefetch=0,
                grid=(num_blocks,),
                in_specs=[row_spec, factor_spec, tgt_spec],
                out_specs=out_spec,
                scratch_shapes=[pltpu.VMEM((1, 1), jnp.float32)],
            ),
            **common,
        )(logits, factor, target.reshape(n, 1))
    else:
        kernel = functools.partial(_ce_kernel, n=n, block_rows=tr)
        out = pl.pallas_call(
            kernel,
            grid_spec=pltpu.PrefetchScalarGridSpec(
                num_scalar_prefetch=0,
                grid=(num_blocks,),
                in_specs=[row_spec, tgt_spec],
                out_specs=out_spec,
                scratch_shapes=[pltpu.VMEM((1, 1), jnp.float32)],
            ),
            **common,
        )(logits, target.reshape(n, 1))

    return out[0, 0]


def _reference(logits, target, factor=None):
    logits = logits.astype(jnp.float32)
    if factor is None:
        lower = logits
    else:
        factor = jnp.broadcast_to(factor, logits.shape).astype(jnp.float32)
        lower = jnp.log(factor) + logits
    m = jnp.max(lower, axis=-1, keepdims=True)
    lse = m + jnp.log(jnp.sum(jnp.exp(lower - m), axis=-1, keepdims=True))
    log_probs = logits - lse
    picked = jnp.take_along_axis(log_probs, target[:, None].astype(jnp.int32),
                                 axis=-1)
    return -jnp.mean(picked)


if __name__ == "__main__":
    key = jax.random.PRNGKey(0)
    k1, k2, k3, k4 = jax.random.split(key, 4)

    # Module-consistent small shapes: N relation proposals x C predicate
    # classes.  N is not a multiple of the sublane tile so tail masking is
    # exercised.
    N, C = 520, 51
    logits = jax.random.normal(k1, (N, C), jnp.float32)
    factor = jax.random.uniform(k2, (N, C), jnp.float32, minval=0.5, maxval=1.5)
    target = jax.random.randint(k3, (N,), 0, C, dtype=jnp.int32)

    # 1) Typical case: dense per-row factor, single-block fast path.
    out = jax.block_until_ready(my_cross_entropy_loss(logits, target, factor))
    ref = _reference(logits, target, factor)
    assert jnp.allclose(out, ref, rtol=1e-5, atol=1e-5), (out, ref)

    # 2) Broadcast (C,) factor with a forced small tile -> multi-block
    #    accumulation path + hoisted log(factor).
    w = jax.random.uniform(k4, (C,), jnp.float32, minval=0.5, maxval=1.5)
    out2 = jax.block_until_ready(
        my_cross_entropy_loss(logits, target, w, block_rows=64))
    ref2 = _reference(logits, target, w)
    assert jnp.allclose(out2, ref2, rtol=1e-5, atol=1e-5), (out2, ref2)

    # 3) factor=None fast path (plain cross-entropy, no factor stream).
    out3 = jax.block_until_ready(my_cross_entropy_loss(logits, target, None))
    ref3 = _reference(logits, target, None)
    assert jnp.allclose(out3, ref3, rtol=1e-5, atol=1e-5), (out3, ref3)

    print("KERNEL_OK")
</pallas_src>

<mosaic_0001>
module attributes {stable_mosaic.version = 11 : i64} {
  func.func @_wce_kernel(%arg0: i32, %arg1: memref<544x51xf32, #tpu.memory_space<vmem>>, %arg2: memref<544x51xf32, #tpu.memory_space<vmem>>, %arg3: memref<544x1xi32, #tpu.memory_space<vmem>>, %arg4: memref<1x1xf32, #tpu.memory_space<vmem>>, %arg5: memref<1x1xf32, #tpu.memory_space<vmem>>) attributes {dimension_semantics = [#tpu.dimension_semantics<arbitrary>], iteration_bounds = array<i64: 1>, scalar_prefetch = 0 : i64, scratch_operands = 1 : i64, tpu.core_type = #tpu.core_type<tc>, window_params = [{transform_indices = @transform_0, window_bounds = array<i64: 544, 51>}, {transform_indices = @transform_1, window_bounds = array<i64: 544, 51>}, {transform_indices = @transform_2, window_bounds = array<i64: 544, 1>}, {pipeline_mode = #tpu.pipeline_mode<synchronous>, transform_indices = @transform_3, window_bounds = array<i64: 1, 1>}]} {
    %c0_i32 = arith.constant 0 : i32
    %0 = arith.cmpi eq, %arg0, %c0_i32 : i32
    %1 = arith.extui %0 : i1 to i32
    %c0_i32_0 = arith.constant 0 : i32
    %2 = arith.cmpi ne, %1, %c0_i32_0 : i32
    scf.if %2 {
      %cst_17 = arith.constant 0.000000e+00 : f32
      %44 = vector.broadcast %cst_17 : f32 to vector<1x1xf32>
      %c0_18 = arith.constant 0 : index
      %c0_19 = arith.constant 0 : index
      %45 = vector.load %arg5[%c0_18, %c0_19] : memref<1x1xf32, #tpu.memory_space<vmem>>, vector<1x1xf32>
      tpu.vector_store %arg5[%c0_18, %c0_19], %44 {strides = array<i32>} : memref<1x1xf32, #tpu.memory_space<vmem>>, vector<1x1xf32>,
    } else {
    }
    %c0 = arith.constant 0 : index
    %c0_1 = arith.constant 0 : index
    %3 = vector.load %arg1[%c0, %c0_1] : memref<544x51xf32, #tpu.memory_space<vmem>>, vector<544x51xf32>
    %c0_2 = arith.constant 0 : index
    %c0_3 = arith.constant 0 : index
    %4 = vector.load %arg2[%c0_2, %c0_3] : memref<544x51xf32, #tpu.memory_space<vmem>>, vector<544x51xf32>
    %5 = math.log %4 : vector<544x51xf32>
    %c0_4 = arith.constant 0 : index
    %c0_5 = arith.constant 0 : index
    %6 = vector.load %arg3[%c0_4, %c0_5] : memref<544x1xi32, #tpu.memory_space<vmem>>, vector<544x1xi32>
    %7 = arith.addf %5, %3 : vector<544x51xf32>
    %cst = arith.constant dense<0xFF800000> : vector<544xf32>
    %8 = vector.multi_reduction <maximumf>, %7, %cst [1] : vector<544x51xf32> to vector<544xf32>
    %9 = vector.shape_cast %8 : vector<544xf32> to vector<544x1xf32>
    %10 = vector.broadcast %9 : vector<544x1xf32> to vector<544x51xf32>
    %11 = arith.subf %7, %10 : vector<544x51xf32>
    %12 = math.exp %11 : vector<544x51xf32>
    %cst_6 = arith.constant dense<0.000000e+00> : vector<544xf32>
    %13 = vector.multi_reduction <add>, %12, %cst_6 [1] : vector<544x51xf32> to vector<544xf32>
    %14 = vector.shape_cast %13 : vector<544xf32> to vector<544x1xf32>
    %15 = math.log %14 : vector<544x1xf32>
    %16 = arith.addf %9, %15 : vector<544x1xf32>
    %17 = tpu.iota {dimensions = array<i32: 1>} : vector<544x51xi32>
    %18 = vector.broadcast %6 : vector<544x1xi32> to vector<544x51xi32>
    %19 = arith.cmpi eq, %17, %18 : vector<544x51xi32>
    %cst_7 = arith.constant 0.000000e+00 : f32
    %20 = vector.broadcast %cst_7 : f32 to vector<544x51xf32>
    %21 = arith.select %19, %3, %20 : vector<544x51xi1>, vector<544x51xf32>
    %cst_8 = arith.constant dense<0.000000e+00> : vector<544xf32>
    %22 = vector.multi_reduction <add>, %21, %cst_8 [1] : vector<544x51xf32> to vector<544xf32>
    %23 = vector.shape_cast %22 : vector<544xf32> to vector<544x1xf32>
    %24 = arith.subf %16, %23 : vector<544x1xf32>
    %c544_i32 = arith.constant 544 : i32
    %25 = arith.muli %arg0, %c544_i32 : i32
    %26 = tpu.iota {dimensions = array<i32: 0>} : vector<544x1xi32>
    %27 = vector.broadcast %25 : i32 to vector<544x1xi32>
    %28 = arith.addi %27, %26 : vector<544x1xi32>
    %c520_i32 = arith.constant 520 : i32
    %29 = vector.broadcast %c520_i32 : i32 to vector<544x1xi32>
    %30 = arith.cmpi slt, %28, %29 : vector<544x1xi32>
    %cst_9 = arith.constant 0.000000e+00 : f32
    %31 = vector.broadcast %cst_9 : f32 to vector<544x1xf32>
    %32 = arith.select %30, %24, %31 : vector<544x1xi1>, vector<544x1xf32>
    %c0_10 = arith.constant 0 : index
    %c0_11 = arith.constant 0 : index
    %33 = vector.load %arg5[%c0_10, %c0_11] : memref<1x1xf32, #tpu.memory_space<vmem>>, vector<1x1xf32>
    %34 = vector.shape_cast %32 : vector<544x1xf32> to vector<1x544x1xf32>
    %cst_12 = arith.constant dense<0.000000e+00> : vector<1xf32>
    %35 = vector.multi_reduction <add>, %34, %cst_12 [1, 2] : vector<1x544x1xf32> to vector<1xf32>
    %36 = vector.shape_cast %35 : vector<1xf32> to vector<1x1x1xf32>
    %37 = vector.extract %36[0, 0, 0] : f32 from vector<1x1x1xf32>
    %38 = vector.broadcast %37 : f32 to vector<1x1xf32>
    %39 = arith.addf %33, %38 : vector<1x1xf32>
    %c0_13 = arith.constant 0 : index
    %c0_14 = arith.constant 0 : index
    %40 = vector.load %arg5[%c0_13, %c0_14] : memref<1x1xf32, #tpu.memory_space<vmem>>, vector<1x1xf32>
    tpu.vector_store %arg5[%c0_13, %c0_14], %39 {strides = array<i32>} : memref<1x1xf32, #tpu.memory_space<vmem>>, vector<1x1xf32>,
    %c0_i32_15 = arith.constant 0 : i32
    %41 = arith.cmpi eq, %arg0, %c0_i32_15 : i32
    %42 = arith.extui %41 : i1 to i32
    %c0_i32_16 = arith.constant 0 : i32
    %43 = arith.cmpi ne, %42, %c0_i32_16 : i32
    scf.if %43 {
      %c0_17 = arith.constant 0 : index
      %c0_18 = arith.constant 0 : index
      %44 = vector.load %arg5[%c0_17, %c0_18] : memref<1x1xf32, #tpu.memory_space<vmem>>, vector<1x1xf32>
      %cst_19 = arith.constant 0.00192307692 : f32
      %45 = vector.broadcast %cst_19 : f32 to vector<1x1xf32>
      %46 = arith.mulf %44, %45 : vector<1x1xf32>
      %c0_20 = arith.constant 0 : index
      %c0_21 = arith.constant 0 : index
      %47 = vector.load %arg4[%c0_20, %c0_21] : memref<1x1xf32, #tpu.memory_space<vmem>>, vector<1x1xf32>
      tpu.vector_store %arg4[%c0_20, %c0_21], %46 {strides = array<i32>} : memref<1x1xf32, #tpu.memory_space<vmem>>, vector<1x1xf32>,
    } else {
    }
    return
  }
  func.func @transform_0(%arg0: i32) -> (i32, i32) {
    %c0_i32 = arith.constant 0 : i32
    %c0_i32_0 = arith.constant 0 : i32
    return %arg0, %c0_i32 : i32, i32
  }
  func.func @transform_1(%arg0: i32) -> (i32, i32) {
    %c0_i32 = arith.constant 0 : i32
    %c0_i32_0 = arith.constant 0 : i32
    return %arg0, %c0_i32 : i32, i32
  }
  func.func @transform_2(%arg0: i32) -> (i32, i32) {
    %c0_i32 = arith.constant 0 : i32
    %c0_i32_0 = arith.constant 0 : i32
    return %arg0, %c0_i32 : i32, i32
  }
  func.func @transform_3(%arg0: i32) -> (i32, i32) {
    %c0_i32 = arith.constant 0 : i32
    %c0_i32_0 = arith.constant 0 : i32
    %c0_i32_1 = arith.constant 0 : i32
    return %c0_i32, %c0_i32_0 : i32, i32
  }
}

</mosaic_0001>

<llo_original>
// kernel: tpu_custom_call.1
$region0: #{tpu_custom_call.1}
  #allocation0 [shape = 'u32[]', space=smem, size = 0x4, offset = 0x4, fixed_abs, tag = 'smem constant byte address 0x4 - core index']
  #allocation1 [shape = 'u32[144,128]{1,0:T(1,128)}', space=vmem, size = 0x12000, scoped, tag = 'internal scratch']
  #allocation2 [shape = 'f32[1,1]{1,0:T(1,128)}', space=vmem, size = 0x200, scoped, tag = 'scratch operand']
  %s0 = inlined_call_operand.vmem [shape: f32[520,51], index: 0, kind: input, shape index: {}]
  %s1 = inlined_call_operand.vmem [shape: f32[520,51], index: 1, kind: input, shape index: {}]
  %s2 = inlined_call_operand.vmem [shape: s32[520,1], index: 2, kind: input, shape index: {}]
  %s3 = inlined_call_operand.hbm [shape: f32[1,1], index: 3, kind: output, shape index: {}]
  %s4 = sld [smem:[#allocation0]]
  $region30: #{tpu_custom_call.1} parent=0
    _
  %s6 = ssub.s32 1, %s4
  %s7 = scalar_select 0, %s6, %s4
  $region1: #{tpu_custom_call.1} parent=0
    #allocation3 [shape = 'u8[512]{0}', space=vmem, size = 0x400, scoped, tag = 'output window, operand 0, single buffered']
    #allocation4 [shape = 's32[1]{0}', space=sflag, size = 0x4, scoped, tag = 'scoped memory for tpu_custom_call.1']
    %8 = vsyncpa [#allocation4], 0
    // Predicated region
    $region2: #{tpu_custom_call.1} parent=1 // pred_check
      _
    $region3: #{tpu_custom_call.1} parent=1 // pred_check_branch
      %10 = sbr.rel (0) target = $region5
    $region4: #{tpu_custom_call.1} parent=1 // pred_region
      _
    $region5: #{tpu_custom_call.1} parent=1 // pred_fallthru
      _
    // Predicated region
    $region6: #{tpu_custom_call.1} parent=1 // pred_check
      _
    $region7: #{tpu_custom_call.1} parent=1 // pred_check_branch
      %12 = sbr.rel (0) target = $region9
    $region8: #{tpu_custom_call.1} parent=1 // pred_region
      _
    $region9: #{tpu_custom_call.1} parent=1 // pred_fallthru
      _
    // Predicated region
    $region10: #{tpu_custom_call.1} parent=1 // pred_check
      _
    $region11: #{tpu_custom_call.1} parent=1 // pred_check_branch
      %14 = sbr.rel (0) target = $region13
    $region12: #{tpu_custom_call.1} parent=1 // pred_region
      _
    $region13: #{tpu_custom_call.1} parent=1 // pred_fallthru
      _
    %p15 = scmp.eq.s32.totalorder 0, 0
    // Predicated region
    $region14: #{tpu_custom_call.1} parent=1 // pred_check
      %p16 = pneg %p15
    $region15: #{tpu_custom_call.1} parent=1 // pred_check_branch
      %18 = sbr.rel (%p16) target = $region17
    $region16: #{tpu_custom_call.1} parent=1 // pred_region
      %vm19 = vcmask 0
      %20 = vst.msk [vmem:[#allocation2] sm:$0x1] %vm19, 0.0
    $region17: #{tpu_custom_call.1} parent=1 // pred_fallthru
      _
    %v21 = vld [vmem:[%s0] sm:$0xff]
    %v22 = vld [vmem:[%s0 + $0x8] sm:$0xff]
    %v23 = vld [vmem:[%s0 + $0x10] sm:$0xff]
    %v24 = vld [vmem:[%s0 + $0x18] sm:$0xff]
    %v25 = vld [vmem:[%s0 + $0x20] sm:$0xff]
    %v26 = vld [vmem:[%s0 + $0x28] sm:$0xff]
    %v27 = vld [vmem:[%s0 + $0x30] sm:$0xff]
    %v28 = vld [vmem:[%s0 + $0x38] sm:$0xff]
    %v29 = vld [vmem:[%s0 + $0x40] sm:$0xff]
    %v30 = vld [vmem:[%s0 + $0x48] sm:$0xff]
    %v31 = vld [vmem:[%s0 + $0x50] sm:$0xff]
    %v32 = vld [vmem:[%s0 + $0x58] sm:$0xff]
    %v33 = vld [vmem:[%s0 + $0x60] sm:$0xff]
    %v34 = vld [vmem:[%s0 + $0x68] sm:$0xff]
    %v35 = vld [vmem:[%s0 + $0x70] sm:$0xff]
    %v36 = vld [vmem:[%s0 + $0x78] sm:$0xff]
    %v37 = vld [vmem:[%s0 + $0x80] sm:$0xff]
    %v38 = vld [vmem:[%s0 + $0x88] sm:$0xff]
    %v39 = vld [vmem:[%s0 + $0x90] sm:$0xff]
    %v40 = vld [vmem:[%s0 + $0x98] sm:$0xff]
    %v41 = vld [vmem:[%s0 + $0xa0] sm:$0xff]
    %v42 = vld [vmem:[%s0 + $0xa8] sm:$0xff]
    %v43 = vld [vmem:[%s0 + $0xb0] sm:$0xff]
    %v44 = vld [vmem:[%s0 + $0xb8] sm:$0xff]
    %v45 = vld [vmem:[%s0 + $0xc0] sm:$0xff]
    %v46 = vld [vmem:[%s0 + $0xc8] sm:$0xff]
    %v47 = vld [vmem:[%s0 + $0xd0] sm:$0xff]
    %v48 = vld [vmem:[%s0 + $0xd8] sm:$0xff]
    %v49 = vld [vmem:[%s0 + $0xe0] sm:$0xff]
    %v50 = vld [vmem:[%s0 + $0xe8] sm:$0xff]
    %v51 = vld [vmem:[%s0 + $0xf0] sm:$0xff]
    %v52 = vld [vmem:[%s0 + $0xf8] sm:$0xff]
    %v53 = vld [vmem:[%s0 + $0x100] sm:$0xff]
    %v54 = vld [vmem:[%s0 + $0x108] sm:$0xff]
    %v55 = vld [vmem:[%s0 + $0x110] sm:$0xff]
    %v56 = vld [vmem:[%s0 + $0x118] sm:$0xff]
    %v57 = vld [vmem:[%s0 + $0x120] sm:$0xff]
    %v58 = vld [vmem:[%s0 + $0x128] sm:$0xff]
    %v59 = vld [vmem:[%s0 + $0x130] sm:$0xff]
    %v60 = vld [vmem:[%s0 + $0x138] sm:$0xff]
    %v61 = vld [vmem:[%s0 + $0x140] sm:$0xff]
    %v62 = vld [vmem:[%s0 + $0x148] sm:$0xff]
    %v63 = vld [vmem:[%s0 + $0x150] sm:$0xff]
    %v64 = vld [vmem:[%s0 + $0x158] sm:$0xff]
    %v65 = vld [vmem:[%s0 + $0x160] sm:$0xff]
    %v66 = vld [vmem:[%s0 + $0x168] sm:$0xff]
    %v67 = vld [vmem:[%s0 + $0x170] sm:$0xff]
    %v68 = vld [vmem:[%s0 + $0x178] sm:$0xff]
    %v69 = vld [vmem:[%s0 + $0x180] sm:$0xff]
    %v70 = vld [vmem:[%s0 + $0x188] sm:$0xff]
    %v71 = vld [vmem:[%s0 + $0x190] sm:$0xff]
    %v72 = vld [vmem:[%s0 + $0x198] sm:$0xff]
    %v73 = vld [vmem:[%s0 + $0x1a0] sm:$0xff]
    %v74 = vld [vmem:[%s0 + $0x1a8] sm:$0xff]
    %v75 = vld [vmem:[%s0 + $0x1b0] sm:$0xff]
    %v76 = vld [vmem:[%s0 + $0x1b8] sm:$0xff]
    %v77 = vld [vmem:[%s0 + $0x1c0] sm:$0xff]
    %v78 = vld [vmem:[%s0 + $0x1c8] sm:$0xff]
    %v79 = vld [vmem:[%s0 + $0x1d0] sm:$0xff]
    %v80 = vld [vmem:[%s0 + $0x1d8] sm:$0xff]
    %v81 = vld [vmem:[%s0 + $0x1e0] sm:$0xff]
    %v82 = vld [vmem:[%s0 + $0x1e8] sm:$0xff]
    %v83 = vld [vmem:[%s0 + $0x1f0] sm:$0xff]
    %v84 = vld [vmem:[%s0 + $0x1f8] sm:$0xff]
    %v85 = vld [vmem:[%s0 + $0x200] sm:$0xff]
    %v86 = vld [vmem:[%s0 + $0x208] sm:$0xff]
    %v87 = vld [vmem:[%s0 + $0x210] sm:$0xff]
    %v88 = vld [vmem:[%s0 + $0x218] sm:$0xff]
    %v89 = vld [vmem:[%s1] sm:$0xff]
    %v90 = vld [vmem:[%s1 + $0x8] sm:$0xff]
    %v91 = vld [vmem:[%s1 + $0x10] sm:$0xff]
    %v92 = vld [vmem:[%s1 + $0x18] sm:$0xff]
    %v93 = vld [vmem:[%s1 + $0x20] sm:$0xff]
    %v94 = vld [vmem:[%s1 + $0x28] sm:$0xff]
    %v95 = vld [vmem:[%s1 + $0x30] sm:$0xff]
    %v96 = vld [vmem:[%s1 + $0x38] sm:$0xff]
    %v97 = vld [vmem:[%s1 + $0x40] sm:$0xff]
    %v98 = vld [vmem:[%s1 + $0x48] sm:$0xff]
    %v99 = vld [vmem:[%s1 + $0x50] sm:$0xff]
    %v100 = vld [vmem:[%s1 + $0x58] sm:$0xff]
    %v101 = vld [vmem:[%s1 + $0x60] sm:$0xff]
    %v102 = vld [vmem:[%s1 + $0x68] sm:$0xff]
    %v103 = vld [vmem:[%s1 + $0x70] sm:$0xff]
    %v104 = vld [vmem:[%s1 + $0x78] sm:$0xff]
    %v105 = vld [vmem:[%s1 + $0x80] sm:$0xff]
    %v106 = vld [vmem:[%s1 + $0x88] sm:$0xff]
    %v107 = vld [vmem:[%s1 + $0x90] sm:$0xff]
    %v108 = vld [vmem:[%s1 + $0x98] sm:$0xff]
    %v109 = vld [vmem:[%s1 + $0xa0] sm:$0xff]
    %v110 = vld [vmem:[%s1 + $0xa8] sm:$0xff]
    %v111 = vld [vmem:[%s1 + $0xb0] sm:$0xff]
    %v112 = vld [vmem:[%s1 + $0xb8] sm:$0xff]
    %v113 = vld [vmem:[%s1 + $0xc0] sm:$0xff]
    %v114 = vld [vmem:[%s1 + $0xc8] sm:$0xff]
    %v115 = vld [vmem:[%s1 + $0xd0] sm:$0xff]
    %v116 = vld [vmem:[%s1 + $0xd8] sm:$0xff]
    %v117 = vld [vmem:[%s1 + $0xe0] sm:$0xff]
    %v118 = vld [vmem:[%s1 + $0xe8] sm:$0xff]
    %v119 = vld [vmem:[%s1 + $0xf0] sm:$0xff]
    %v120 = vld [vmem:[%s1 + $0xf8] sm:$0xff]
    %v121 = vld [vmem:[%s1 + $0x100] sm:$0xff]
    %v122 = vld [vmem:[%s1 + $0x108] sm:$0xff]
    %v123 = vld [vmem:[%s1 + $0x110] sm:$0xff]
    %v124 = vld [vmem:[%s1 + $0x118] sm:$0xff]
    %v125 = vld [vmem:[%s1 + $0x120] sm:$0xff]
    %v126 = vld [vmem:[%s1 + $0x128] sm:$0xff]
    %v127 = vld [vmem:[%s1 + $0x130] sm:$0xff]
    %v128 = vld [vmem:[%s1 + $0x138] sm:$0xff]
    %v129 = vld [vmem:[%s1 + $0x140] sm:$0xff]
    %v130 = vld [vmem:[%s1 + $0x148] sm:$0xff]
    %v131 = vld [vmem:[%s1 + $0x150] sm:$0xff]
    %v132 = vld [vmem:[%s1 + $0x158] sm:$0xff]
    %v133 = vld [vmem:[%s1 + $0x160] sm:$0xff]
    %v134 = vld [vmem:[%s1 + $0x168] sm:$0xff]
    %v135 = vld [vmem:[%s1 + $0x170] sm:$0xff]
    %v136 = vld [vmem:[%s1 + $0x178] sm:$0xff]
    %v137 = vld [vmem:[%s1 + $0x180] sm:$0xff]
    %v138 = vld [vmem:[%s1 + $0x188] sm:$0xff]
    %v139 = vld [vmem:[%s1 + $0x190] sm:$0xff]
    %v140 = vld [vmem:[%s1 + $0x198] sm:$0xff]
    %v141 = vld [vmem:[%s1 + $0x1a0] sm:$0xff]
    %v142 = vld [vmem:[%s1 + $0x1a8] sm:$0xff]
    %v143 = vld [vmem:[%s1 + $0x1b0] sm:$0xff]
    %v144 = vld [vmem:[%s1 + $0x1b8] sm:$0xff]
    %v145 = vld [vmem:[%s1 + $0x1c0] sm:$0xff]
    %v146 = vld [vmem:[%s1 + $0x1c8] sm:$0xff]
    %v147 = vld [vmem:[%s1 + $0x1d0] sm:$0xff]
    %v148 = vld [vmem:[%s1 + $0x1d8] sm:$0xff]
    %v149 = vld [vmem:[%s1 + $0x1e0] sm:$0xff]
    %v150 = vld [vmem:[%s1 + $0x1e8] sm:$0xff]
    %v151 = vld [vmem:[%s1 + $0x1f0] sm:$0xff]
    %v152 = vld [vmem:[%s1 + $0x1f8] sm:$0xff]
    %v153 = vld [vmem:[%s1 + $0x200] sm:$0xff]
    %v154 = vld [vmem:[%s1 + $0x208] sm:$0xff]
    %v155 = vld [vmem:[%s1 + $0x210] sm:$0xff]
    %v156 = vld [vmem:[%s1 + $0x218] sm:$0xff]
    %v157 = vlog2.pop %v89
    %v158 = vmul.f32 %v157, 0.6931472
    %v159 = vlog2.pop %v90
    %v160 = vmul.f32 %v159, 0.6931472
    %v161 = vlog2.pop %v91
    %v162 = vmul.f32 %v161, 0.6931472
    %v163 = vlog2.pop %v92
    %v164 = vmul.f32 %v163, 0.6931472
    %v165 = vlog2.pop %v93
    %v166 = vmul.f32 %v165, 0.6931472
    %v167 = vlog2.pop %v94
    %v168 = vmul.f32 %v167, 0.6931472
    %v169 = vlog2.pop %v95
    %v170 = vmul.f32 %v169, 0.6931472
    %v171 = vlog2.pop %v96
    %v172 = vmul.f32 %v171, 0.6931472
    %v173 = vlog2.pop %v97
    %v174 = vmul.f32 %v173, 0.6931472
    %v175 = vlog2.pop %v98
    %v176 = vmul.f32 %v175, 0.6931472
    %v177 = vlog2.pop %v99
    %v178 = vmul.f32 %v177, 0.6931472
    %v179 = vlog2.pop %v100
    %v180 = vmul.f32 %v179, 0.6931472
    %v181 = vlog2.pop %v101
    %v182 = vmul.f32 %v181, 0.6931472
    %v183 = vlog2.pop %v102
    %v184 = vmul.f32 %v183, 0.6931472
    %v185 = vlog2.pop %v103
    %v186 = vmul.f32 %v185, 0.6931472
    %v187 = vlog2.pop %v104
    %v188 = vmul.f32 %v187, 0.6931472
    %v189 = vlog2.pop %v105
    %v190 = vmul.f32 %v189, 0.6931472
    %v191 = vlog2.pop %v106
    %v192 = vmul.f32 %v191, 0.6931472
    %v193 = vlog2.pop %v107
    %v194 = vmul.f32 %v193, 0.6931472
    %v195 = vlog2.pop %v108
    %v196 = vmul.f32 %v195, 0.6931472
    %v197 = vlog2.pop %v109
    %v198 = vmul.f32 %v197, 0.6931472
    %v199 = vlog2.pop %v110
    %v200 = vmul.f32 %v199, 0.6931472
    %v201 = vlog2.pop %v111
    %v202 = vmul.f32 %v201, 0.6931472
    %v203 = vlog2.pop %v112
    %v204 = vmul.f32 %v203, 0.6931472
    %v205 = vlog2.pop %v113
    %v206 = vmul.f32 %v205, 0.6931472
    %v207 = vlog2.pop %v114
    %v208 = vmul.f32 %v207, 0.6931472
    %v209 = vlog2.pop %v115
    %v210 = vmul.f32 %v209, 0.6931472
    %v211 = vlog2.pop %v116
    %v212 = vmul.f32 %v211, 0.6931472
    %v213 = vlog2.pop %v117
    %v214 = vmul.f32 %v213, 0.6931472
    %v215 = vlog2.pop %v118
    %v216 = vmul.f32 %v215, 0.6931472
    %v217 = vlog2.pop %v119
    %v218 = vmul.f32 %v217, 0.6931472
    %v219 = vlog2.pop %v120
    %v220 = vmul.f32 %v219, 0.6931472
    %v221 = vlog2.pop %v121
    %v222 = vmul.f32 %v221, 0.6931472
    %v223 = vlog2.pop %v122
    %v224 = vmul.f32 %v223, 0.6931472
    %v225 = vlog2.pop %v123
    %v226 = vmul.f32 %v225, 0.6931472
    %v227 = vlog2.pop %v124
    %v228 = vmul.f32 %v227, 0.6931472
    %v229 = vlog2.pop %v125
    %v230 = vmul.f32 %v229, 0.6931472
    %v231 = vlog2.pop %v126
    %v232 = vmul.f32 %v231, 0.6931472
    %v233 = vlog2.pop %v127
    %v234 = vmul.f32 %v233, 0.6931472
    %v235 = vlog2.pop %v128
    %v236 = vmul.f32 %v235, 0.6931472
    %v237 = vlog2.pop %v129
    %v238 = vmul.f32 %v237, 0.6931472
    %v239 = vlog2.pop %v130
    %v240 = vmul.f32 %v239, 0.6931472
    %v241 = vlog2.pop %v131
    %v242 = vmul.f32 %v241, 0.6931472
    %v243 = vlog2.pop %v132
    %v244 = vmul.f32 %v243, 0.6931472
    %v245 = vlog2.pop %v133
    %v246 = vmul.f32 %v245, 0.6931472
    %v247 = vlog2.pop %v134
    %v248 = vmul.f32 %v247, 0.6931472
    %v249 = vlog2.pop %v135
    %v250 = vmul.f32 %v249, 0.6931472
    %v251 = vlog2.pop %v136
    %v252 = vmul.f32 %v251, 0.6931472
    %v253 = vlog2.pop %v137
    %v254 = vmul.f32 %v253, 0.6931472
    %v255 = vlog2.pop %v138
    %v256 = vmul.f32 %v255, 0.6931472
    %v257 = vlog2.pop %v139
    %v258 = vmul.f32 %v257, 0.6931472
    %v259 = vlog2.pop %v140
    %v260 = vmul.f32 %v259, 0.6931472
    %v261 = vlog2.pop %v141
    %v262 = vmul.f32 %v261, 0.6931472
    %v263 = vlog2.pop %v142
    %v264 = vmul.f32 %v263, 0.6931472
    %v265 = vlog2.pop %v143
    %v266 = vmul.f32 %v265, 0.6931472
    %v267 = vlog2.pop %v144
    %v268 = vmul.f32 %v267, 0.6931472
    %v269 = vlog2.pop %v145
    %v270 = vmul.f32 %v269, 0.6931472
    %v271 = vlog2.pop %v146
    %v272 = vmul.f32 %v271, 0.6931472
    %v273 = vlog2.pop %v147
    %v274 = vmul.f32 %v273, 0.6931472
    %v275 = vlog2.pop %v148
    %v276 = vmul.f32 %v275, 0.6931472
    %v277 = vlog2.pop %v149
    %v278 = vmul.f32 %v277, 0.6931472
    %v279 = vlog2.pop %v150
    %v280 = vmul.f32 %v279, 0.6931472
    %v281 = vlog2.pop %v151
    %v282 = vmul.f32 %v281, 0.6931472
    %v283 = vlog2.pop %v152
    %v284 = vmul.f32 %v283, 0.6931472
    %v285 = vlog2.pop %v153
    %v286 = vmul.f32 %v285, 0.6931472
    %v287 = vlog2.pop %v154
    %v288 = vmul.f32 %v287, 0.6931472
    %v289 = vlog2.pop %v155
    %v290 = vmul.f32 %v289, 0.6931472
    %v291 = vlog2.pop %v156
    %v292 = vmul.f32 %v291, 0.6931472
    %v293 = vld [vmem:[%s2] sm:$0xff]
    %v294 = vld [vmem:[%s2 + $0x8] sm:$0xff]
    %v295 = vld [vmem:[%s2 + $0x10] sm:$0xff]
    %v296 = vld [vmem:[%s2 + $0x18] sm:$0xff]
    %v297 = vld [vmem:[%s2 + $0x20] sm:$0xff]
    %v298 = vld [vmem:[%s2 + $0x28] sm:$0xff]
    %v299 = vld [vmem:[%s2 + $0x30] sm:$0xff]
    %v300 = vld [vmem:[%s2 + $0x38] sm:$0xff]
    %v301 = vld [vmem:[%s2 + $0x40] sm:$0xff]
    %v302 = vld [vmem:[%s2 + $0x48] sm:$0xff]
    %v303 = vld [vmem:[%s2 + $0x50] sm:$0xff]
    %v304 = vld [vmem:[%s2 + $0x58] sm:$0xff]
    %v305 = vld [vmem:[%s2 + $0x60] sm:$0xff]
    %v306 = vld [vmem:[%s2 + $0x68] sm:$0xff]
    %v307 = vld [vmem:[%s2 + $0x70] sm:$0xff]
    %v308 = vld [vmem:[%s2 + $0x78] sm:$0xff]
    %v309 = vld [vmem:[%s2 + $0x80] sm:$0xff]
    %v310 = vld [vmem:[%s2 + $0x88] sm:$0xff]
    %v311 = vld [vmem:[%s2 + $0x90] sm:$0xff]
    %v312 = vld [vmem:[%s2 + $0x98] sm:$0xff]
    %v313 = vld [vmem:[%s2 + $0xa0] sm:$0xff]
    %v314 = vld [vmem:[%s2 + $0xa8] sm:$0xff]
    %v315 = vld [vmem:[%s2 + $0xb0] sm:$0xff]
    %v316 = vld [vmem:[%s2 + $0xb8] sm:$0xff]
    %v317 = vld [vmem:[%s2 + $0xc0] sm:$0xff]
    %v318 = vld [vmem:[%s2 + $0xc8] sm:$0xff]
    %v319 = vld [vmem:[%s2 + $0xd0] sm:$0xff]
    %v320 = vld [vmem:[%s2 + $0xd8] sm:$0xff]
    %v321 = vld [vmem:[%s2 + $0xe0] sm:$0xff]
    %v322 = vld [vmem:[%s2 + $0xe8] sm:$0xff]
    %v323 = vld [vmem:[%s2 + $0xf0] sm:$0xff]
    %v324 = vld [vmem:[%s2 + $0xf8] sm:$0xff]
    %v325 = vld [vmem:[%s2 + $0x100] sm:$0xff]
    %v326 = vld [vmem:[%s2 + $0x108] sm:$0xff]
    %v327 = vld [vmem:[%s2 + $0x110] sm:$0xff]
    %v328 = vld [vmem:[%s2 + $0x118] sm:$0xff]
    %v329 = vld [vmem:[%s2 + $0x120] sm:$0xff]
    %v330 = vld [vmem:[%s2 + $0x128] sm:$0xff]
    %v331 = vld [vmem:[%s2 + $0x130] sm:$0xff]
    %v332 = vld [vmem:[%s2 + $0x138] sm:$0xff]
    %v333 = vld [vmem:[%s2 + $0x140] sm:$0xff]
    %v334 = vld [vmem:[%s2 + $0x148] sm:$0xff]
    %v335 = vld [vmem:[%s2 + $0x150] sm:$0xff]
    %v336 = vld [vmem:[%s2 + $0x158] sm:$0xff]
    %v337 = vld [vmem:[%s2 + $0x160] sm:$0xff]
    %v338 = vld [vmem:[%s2 + $0x168] sm:$0xff]
    %v339 = vld [vmem:[%s2 + $0x170] sm:$0xff]
    %v340 = vld [vmem:[%s2 + $0x178] sm:$0xff]
    %v341 = vld [vmem:[%s2 + $0x180] sm:$0xff]
    %v342 = vld [vmem:[%s2 + $0x188] sm:$0xff]
    %v343 = vld [vmem:[%s2 + $0x190] sm:$0xff]
    %v344 = vld [vmem:[%s2 + $0x198] sm:$0xff]
    %v345 = vld [vmem:[%s2 + $0x1a0] sm:$0xff]
    %v346 = vld [vmem:[%s2 + $0x1a8] sm:$0xff]
    %v347 = vld [vmem:[%s2 + $0x1b0] sm:$0xff]
    %v348 = vld [vmem:[%s2 + $0x1b8] sm:$0xff]
    %v349 = vld [vmem:[%s2 + $0x1c0] sm:$0xff]
    %v350 = vld [vmem:[%s2 + $0x1c8] sm:$0xff]
    %v351 = vld [vmem:[%s2 + $0x1d0] sm:$0xff]
    %v352 = vld [vmem:[%s2 + $0x1d8] sm:$0xff]
    %v353 = vld [vmem:[%s2 + $0x1e0] sm:$0xff]
    %v354 = vld [vmem:[%s2 + $0x1e8] sm:$0xff]
    %v355 = vld [vmem:[%s2 + $0x1f0] sm:$0xff]
    %v356 = vld [vmem:[%s2 + $0x1f8] sm:$0xff]
    %v357 = vld [vmem:[%s2 + $0x200] sm:$0xff]
    %v358 = vld [vmem:[%s2 + $0x208] sm:$0xff]
    %v359 = vld [vmem:[%s2 + $0x210] sm:$0xff]
    %v360 = vld [vmem:[%s2 + $0x218] sm:$0xff]
    %v361 = vadd.f32 %v158, %v21
    %v362 = vadd.f32 %v160, %v22
    %v363 = vadd.f32 %v162, %v23
    %v364 = vadd.f32 %v164, %v24
    %v365 = vadd.f32 %v166, %v25
    %v366 = vadd.f32 %v168, %v26
    %v367 = vadd.f32 %v170, %v27
    %v368 = vadd.f32 %v172, %v28
    %v369 = vadd.f32 %v174, %v29
    %v370 = vadd.f32 %v176, %v30
    %v371 = vadd.f32 %v178, %v31
    %v372 = vadd.f32 %v180, %v32
    %v373 = vadd.f32 %v182, %v33
    %v374 = vadd.f32 %v184, %v34
    %v375 = vadd.f32 %v186, %v35
    %v376 = vadd.f32 %v188, %v36
    %v377 = vadd.f32 %v190, %v37
    %v378 = vadd.f32 %v192, %v38
    %v379 = vadd.f32 %v194, %v39
    %v380 = vadd.f32 %v196, %v40
    %v381 = vadd.f32 %v198, %v41
    %v382 = vadd.f32 %v200, %v42
    %v383 = vadd.f32 %v202, %v43
    %v384 = vadd.f32 %v204, %v44
    %v385 = vadd.f32 %v206, %v45
    %v386 = vadd.f32 %v208, %v46
    %v387 = vadd.f32 %v210, %v47
    %v388 = vadd.f32 %v212, %v48
    %v389 = vadd.f32 %v214, %v49
    %v390 = vadd.f32 %v216, %v50
    %v391 = vadd.f32 %v218, %v51
    %v392 = vadd.f32 %v220, %v52
    %v393 = vadd.f32 %v222, %v53
    %v394 = vadd.f32 %v224, %v54
    %v395 = vadd.f32 %v226, %v55
    %v396 = vadd.f32 %v228, %v56
    %v397 = vadd.f32 %v230, %v57
    %v398 = vadd.f32 %v232, %v58
    %v399 = vadd.f32 %v234, %v59
    %v400 = vadd.f32 %v236, %v60
    %v401 = vadd.f32 %v238, %v61
    %v402 = vadd.f32 %v240, %v62
    %v403 = vadd.f32 %v242, %v63
    %v404 = vadd.f32 %v244, %v64
    %v405 = vadd.f32 %v246, %v65
    %v406 = vadd.f32 %v248, %v66
    %v407 = vadd.f32 %v250, %v67
    %v408 = vadd.f32 %v252, %v68
    %v409 = vadd.f32 %v254, %v69
    %v410 = vadd.f32 %v256, %v70
    %v411 = vadd.f32 %v258, %v71
    %v412 = vadd.f32 %v260, %v72
    %v413 = vadd.f32 %v262, %v73
    %v414 = vadd.f32 %v264, %v74
    %v415 = vadd.f32 %v266, %v75
    %v416 = vadd.f32 %v268, %v76
    %v417 = vadd.f32 %v270, %v77
    %v418 = vadd.f32 %v272, %v78
    %v419 = vadd.f32 %v274, %v79
    %v420 = vadd.f32 %v276, %v80
    %v421 = vadd.f32 %v278, %v81
    %v422 = vadd.f32 %v280, %v82
    %v423 = vadd.f32 %v282, %v83
    %v424 = vadd.f32 %v284, %v84
    %v425 = vadd.f32 %v286, %v85
    %v426 = vadd.f32 %v288, %v86
    %v427 = vadd.f32 %v290, %v87
    %v428 = vadd.f32 %v292, %v88
    %vm429 = vcmask 416768
    %v430 = vsel %vm429, %v361, -inf
    %431 = vmax.xlane.f32.xlu0 %v430
    %v432 = vpop.xlane.xlu0 %431
    %v433 = vsel %vm429, %v362, -inf
    %434 = vmax.xlane.f32.xlu0 %v433
    %v435 = vpop.xlane.xlu0 %434
    %v436 = vsel %vm429, %v363, -inf
    %437 = vmax.xlane.f32.xlu0 %v436
    %v438 = vpop.xlane.xlu0 %437
    %v439 = vsel %vm429, %v364, -inf
    %440 = vmax.xlane.f32.xlu0 %v439
    %v441 = vpop.xlane.xlu0 %440
    %v442 = vsel %vm429, %v365, -inf
    %443 = vmax.xlane.f32.xlu0 %v442
    %v444 = vpop.xlane.xlu0 %443
    %v445 = vsel %vm429, %v366, -inf
    %446 = vmax.xlane.f32.xlu0 %v445
    %v447 = vpop.xlane.xlu0 %446
    %v448 = vsel %vm429, %v367, -inf
    %449 = vmax.xlane.f32.xlu0 %v448
    %v450 = vpop.xlane.xlu0 %449
    %v451 = vsel %vm429, %v368, -inf
    %452 = vmax.xlane.f32.xlu0 %v451
    %v453 = vpop.xlane.xlu0 %452
    %v454 = vsel %vm429, %v369, -inf
    %455 = vmax.xlane.f32.xlu0 %v454
    %v456 = vpop.xlane.xlu0 %455
    %v457 = vsel %vm429, %v370, -inf
    %458 = vmax.xlane.f32.xlu0 %v457
    %v459 = vpop.xlane.xlu0 %458
    %v460 = vsel %vm429, %v371, -inf
    %461 = vmax.xlane.f32.xlu0 %v460
    %v462 = vpop.xlane.xlu0 %461
    %v463 = vsel %vm429, %v372, -inf
    %464 = vmax.xlane.f32.xlu0 %v463
    %v465 = vpop.xlane.xlu0 %464
    %v466 = vsel %vm429, %v373, -inf
    %467 = vmax.xlane.f32.xlu0 %v466
    %v468 = vpop.xlane.xlu0 %467
    %v469 = vsel %vm429, %v374, -inf
    %470 = vmax.xlane.f32.xlu0 %v469
    %v471 = vpop.xlane.xlu0 %470
    %v472 = vsel %vm429, %v375, -inf
    %473 = vmax.xlane.f32.xlu0 %v472
    %v474 = vpop.xlane.xlu0 %473
    %v475 = vsel %vm429, %v376, -inf
    %476 = vmax.xlane.f32.xlu0 %v475
    %v477 = vpop.xlane.xlu0 %476
    %v478 = vsel %vm429, %v377, -inf
    %479 = vmax.xlane.f32.xlu0 %v478
    %v480 = vpop.xlane.xlu0 %479
    %v481 = vsel %vm429, %v378, -inf
    %482 = vmax.xlane.f32.xlu0 %v481
    %v483 = vpop.xlane.xlu0 %482
    %v484 = vsel %vm429, %v379, -inf
    %485 = vmax.xlane.f32.xlu0 %v484
    %v486 = vpop.xlane.xlu0 %485
    %v487 = vsel %vm429, %v380, -inf
    %488 = vmax.xlane.f32.xlu0 %v487
    %v489 = vpop.xlane.xlu0 %488
    %v490 = vsel %vm429, %v381, -inf
    %491 = vmax.xlane.f32.xlu0 %v490
    %v492 = vpop.xlane.xlu0 %491
    %v493 = vsel %vm429, %v382, -inf
    %494 = vmax.xlane.f32.xlu0 %v493
    %v495 = vpop.xlane.xlu0 %494
    %v496 = vsel %vm429, %v383, -inf
    %497 = vmax.xlane.f32.xlu0 %v496
    %v498 = vpop.xlane.xlu0 %497
    %v499 = vsel %vm429, %v384, -inf
    %500 = vmax.xlane.f32.xlu0 %v499
    %v501 = vpop.xlane.xlu0 %500
    %v502 = vsel %vm429, %v385, -inf
    %503 = vmax.xlane.f32.xlu0 %v502
    %v504 = vpop.xlane.xlu0 %503
    %v505 = vsel %vm429, %v386, -inf
    %506 = vmax.xlane.f32.xlu0 %v505
    %v507 = vpop.xlane.xlu0 %506
    %v508 = vsel %vm429, %v387, -inf
    %509 = vmax.xlane.f32.xlu0 %v508
    %v510 = vpop.xlane.xlu0 %509
    %v511 = vsel %vm429, %v388, -inf
    %512 = vmax.xlane.f32.xlu0 %v511
    %v513 = vpop.xlane.xlu0 %512
    %v514 = vsel %vm429, %v389, -inf
    %515 = vmax.xlane.f32.xlu0 %v514
    %v516 = vpop.xlane.xlu0 %515
    %v517 = vsel %vm429, %v390, -inf
    %518 = vmax.xlane.f32.xlu0 %v517
    %v519 = vpop.xlane.xlu0 %518
    %v520 = vsel %vm429, %v391, -inf
    %521 = vmax.xlane.f32.xlu0 %v520
    %v522 = vpop.xlane.xlu0 %521
    %v523 = vsel %vm429, %v392, -inf
    %524 = vmax.xlane.f32.xlu0 %v523
    %v525 = vpop.xlane.xlu0 %524
    %v526 = vsel %vm429, %v393, -inf
    %527 = vmax.xlane.f32.xlu0 %v526
    %v528 = vpop.xlane.xlu0 %527
    %v529 = vsel %vm429, %v394, -inf
    %530 = vmax.xlane.f32.xlu0 %v529
    %v531 = vpop.xlane.xlu0 %530
    %v532 = vsel %vm429, %v395, -inf
    %533 = vmax.xlane.f32.xlu0 %v532
    %v534 = vpop.xlane.xlu0 %533
    %v535 = vsel %vm429, %v396, -inf
    %536 = vmax.xlane.f32.xlu0 %v535
    %v537 = vpop.xlane.xlu0 %536
    %v538 = vsel %vm429, %v397, -inf
    %539 = vmax.xlane.f32.xlu0 %v538
    %v540 = vpop.xlane.xlu0 %539
    %v541 = vsel %vm429, %v398, -inf
    %542 = vmax.xlane.f32.xlu0 %v541
    %v543 = vpop.xlane.xlu0 %542
    %v544 = vsel %vm429, %v399, -inf
    %545 = vmax.xlane.f32.xlu0 %v544
    %v546 = vpop.xlane.xlu0 %545
    %v547 = vsel %vm429, %v400, -inf
    %548 = vmax.xlane.f32.xlu0 %v547
    %v549 = vpop.xlane.xlu0 %548
    %v550 = vsel %vm429, %v401, -inf
    %551 = vmax.xlane.f32.xlu0 %v550
    %v552 = vpop.xlane.xlu0 %551
    %v553 = vsel %vm429, %v402, -inf
    %554 = vmax.xlane.f32.xlu0 %v553
    %v555 = vpop.xlane.xlu0 %554
    %v556 = vsel %vm429, %v403, -inf
    %557 = vmax.xlane.f32.xlu0 %v556
    %v558 = vpop.xlane.xlu0 %557
    %v559 = vsel %vm429, %v404, -inf
    %560 = vmax.xlane.f32.xlu0 %v559
    %v561 = vpop.xlane.xlu0 %560
    %v562 = vsel %vm429, %v405, -inf
    %563 = vmax.xlane.f32.xlu0 %v562
    %v564 = vpop.xlane.xlu0 %563
    %v565 = vsel %vm429, %v406, -inf
    %566 = vmax.xlane.f32.xlu0 %v565
    %v567 = vpop.xlane.xlu0 %566
    %v568 = vsel %vm429, %v407, -inf
    %569 = vmax.xlane.f32.xlu0 %v568
    %v570 = vpop.xlane.xlu0 %569
    %v571 = vsel %vm429, %v408, -inf
    %572 = vmax.xlane.f32.xlu0 %v571
    %v573 = vpop.xlane.xlu0 %572
    %v574 = vsel %vm429, %v409, -inf
    %575 = vmax.xlane.f32.xlu0 %v574
    %v576 = vpop.xlane.xlu0 %575
    %v577 = vsel %vm429, %v410, -inf
    %578 = vmax.xlane.f32.xlu0 %v577
    %v579 = vpop.xlane.xlu0 %578
    %v580 = vsel %vm429, %v411, -inf
    %581 = vmax.xlane.f32.xlu0 %v580
    %v582 = vpop.xlane.xlu0 %581
    %v583 = vsel %vm429, %v412, -inf
    %584 = vmax.xlane.f32.xlu0 %v583
    %v585 = vpop.xlane.xlu0 %584
    %v586 = vsel %vm429, %v413, -inf
    %587 = vmax.xlane.f32.xlu0 %v586
    %v588 = vpop.xlane.xlu0 %587
    %v589 = vsel %vm429, %v414, -inf
    %590 = vmax.xlane.f32.xlu0 %v589
    %v591 = vpop.xlane.xlu0 %590
    %v592 = vsel %vm429, %v415, -inf
    %593 = vmax.xlane.f32.xlu0 %v592
    %v594 = vpop.xlane.xlu0 %593
    %v595 = vsel %vm429, %v416, -inf
    %596 = vmax.xlane.f32.xlu0 %v595
    %v597 = vpop.xlane.xlu0 %596
    %v598 = vsel %vm429, %v417, -inf
    %599 = vmax.xlane.f32.xlu0 %v598
    %v600 = vpop.xlane.xlu0 %599
    %v601 = vsel %vm429, %v418, -inf
    %602 = vmax.xlane.f32.xlu0 %v601
    %v603 = vpop.xlane.xlu0 %602
    %v604 = vsel %vm429, %v419, -inf
    %605 = vmax.xlane.f32.xlu0 %v604
    %v606 = vpop.xlane.xlu0 %605
    %v607 = vsel %vm429, %v420, -inf
    %608 = vmax.xlane.f32.xlu0 %v607
    %v609 = vpop.xlane.xlu0 %608
    %v610 = vsel %vm429, %v421, -inf
    %611 = vmax.xlane.f32.xlu0 %v610
    %v612 = vpop.xlane.xlu0 %611
    %v613 = vsel %vm429, %v422, -inf
    %614 = vmax.xlane.f32.xlu0 %v613
    %v615 = vpop.xlane.xlu0 %614
    %v616 = vsel %vm429, %v423, -inf
    %617 = vmax.xlane.f32.xlu0 %v616
    %v618 = vpop.xlane.xlu0 %617
    %v619 = vsel %vm429, %v424, -inf
    %620 = vmax.xlane.f32.xlu0 %v619
    %v621 = vpop.xlane.xlu0 %620
    %v622 = vsel %vm429, %v425, -inf
    %623 = vmax.xlane.f32.xlu0 %v622
    %v624 = vpop.xlane.xlu0 %623
    %v625 = vsel %vm429, %v426, -inf
    %626 = vmax.xlane.f32.xlu0 %v625
    %v627 = vpop.xlane.xlu0 %626
    %v628 = vsel %vm429, %v427, -inf
    %629 = vmax.xlane.f32.xlu0 %v628
    %v630 = vpop.xlane.xlu0 %629
    %v631 = vsel %vm429, %v428, -inf
    %632 = vmax.xlane.f32.xlu0 %v631
    %v633 = vpop.xlane.xlu0 %632
    %v634 = vsub.f32 %v361, %v432
    %v635 = vsub.f32 %v362, %v435
    %v636 = vsub.f32 %v363, %v438
    %v637 = vsub.f32 %v364, %v441
    %v638 = vsub.f32 %v365, %v444
    %v639 = vsub.f32 %v366, %v447
    %v640 = vsub.f32 %v367, %v450
    %v641 = vsub.f32 %v368, %v453
    %v642 = vsub.f32 %v369, %v456
    %v643 = vsub.f32 %v370, %v459
    %v644 = vsub.f32 %v371, %v462
    %v645 = vsub.f32 %v372, %v465
    %v646 = vsub.f32 %v373, %v468
    %v647 = vsub.f32 %v374, %v471
    %v648 = vsub.f32 %v375, %v474
    %v649 = vsub.f32 %v376, %v477
    %v650 = vsub.f32 %v377, %v480
    %v651 = vsub.f32 %v378, %v483
    %v652 = vsub.f32 %v379, %v486
    %v653 = vsub.f32 %v380, %v489
    %v654 = vsub.f32 %v381, %v492
    %v655 = vsub.f32 %v382, %v495
    %v656 = vsub.f32 %v383, %v498
    %v657 = vsub.f32 %v384, %v501
    %v658 = vsub.f32 %v385, %v504
    %v659 = vsub.f32 %v386, %v507
    %v660 = vsub.f32 %v387, %v510
    %v661 = vsub.f32 %v388, %v513
    %v662 = vsub.f32 %v389, %v516
    %v663 = vsub.f32 %v390, %v519
    %v664 = vsub.f32 %v391, %v522
    %v665 = vsub.f32 %v392, %v525
    %v666 = vsub.f32 %v393, %v528
    %v667 = vsub.f32 %v394, %v531
    %v668 = vsub.f32 %v395, %v534
    %v669 = vsub.f32 %v396, %v537
    %v670 = vsub.f32 %v397, %v540
    %v671 = vsub.f32 %v398, %v543
    %v672 = vsub.f32 %v399, %v546
    %v673 = vsub.f32 %v400, %v549
    %v674 = vsub.f32 %v401, %v552
    %v675 = vsub.f32 %v402, %v555
    %v676 = vsub.f32 %v403, %v558
    %v677 = vsub.f32 %v404, %v561
    %v678 = vsub.f32 %v405, %v564
    %v679 = vsub.f32 %v406, %v567
    %v680 = vsub.f32 %v407, %v570
    %v681 = vsub.f32 %v408, %v573
    %v682 = vsub.f32 %v409, %v576
    %v683 = vsub.f32 %v410, %v579
    %v684 = vsub.f32 %v411, %v582
    %v685 = vsub.f32 %v412, %v585
    %v686 = vsub.f32 %v413, %v588
    %v687 = vsub.f32 %v414, %v591
    %v688 = vsub.f32 %v415, %v594
    %v689 = vsub.f32 %v416, %v597
    %v690 = vsub.f32 %v417, %v600
    %v691 = vsub.f32 %v418, %v603
    %v692 = vsub.f32 %v419, %v606
    %v693 = vsub.f32 %v420, %v609
    %v694 = vsub.f32 %v421, %v612
    %v695 = vsub.f32 %v422, %v615
    %v696 = vsub.f32 %v423, %v618
    %v697 = vsub.f32 %v424, %v621
    %v698 = vsub.f32 %v425, %v624
    %v699 = vsub.f32 %v426, %v627
    %v700 = vsub.f32 %v427, %v630
    %v701 = vsub.f32 %v428, %v633
    %v702 = vmul.f32 %v634, 1.442695
    %v703 = vpow.pop %v702
    %v704 = vmul.f32 %v635, 1.442695
    %v705 = vpow.pop %v704
    %v706 = vmul.f32 %v636, 1.442695
    %v707 = vpow.pop %v706
    %v708 = vmul.f32 %v637, 1.442695
    %v709 = vpow.pop %v708
    %v710 = vmul.f32 %v638, 1.442695
    %v711 = vpow.pop %v710
    %v712 = vmul.f32 %v639, 1.442695
    %v713 = vpow.pop %v712
    %v714 = vmul.f32 %v640, 1.442695
    %v715 = vpow.pop %v714
    %v716 = vmul.f32 %v641, 1.442695
    %v717 = vpow.pop %v716
    %v718 = vmul.f32 %v642, 1.442695
    %v719 = vpow.pop %v718
    %v720 = vmul.f32 %v643, 1.442695
    %v721 = vpow.pop %v720
    %v722 = vmul.f32 %v644, 1.442695
    %v723 = vpow.pop %v722
    %v724 = vmul.f32 %v645, 1.442695
    %v725 = vpow.pop %v724
    %v726 = vmul.f32 %v646, 1.442695
    %v727 = vpow.pop %v726
    %v728 = vmul.f32 %v647, 1.442695
    %v729 = vpow.pop %v728
    %v730 = vmul.f32 %v648, 1.442695
    %v731 = vpow.pop %v730
    %v732 = vmul.f32 %v649, 1.442695
    %v733 = vpow.pop %v732
    %v734 = vmul.f32 %v650, 1.442695
    %v735 = vpow.pop %v734
    %v736 = vmul.f32 %v651, 1.442695
    %v737 = vpow.pop %v736
    %v738 = vmul.f32 %v652, 1.442695
    %v739 = vpow.pop %v738
    %v740 = vmul.f32 %v653, 1.442695
    %v741 = vpow.pop %v740
    %v742 = vmul.f32 %v654, 1.442695
    %v743 = vpow.pop %v742
    %v744 = vmul.f32 %v655, 1.442695
    %v745 = vpow.pop %v744
    %v746 = vmul.f32 %v656, 1.442695
    %v747 = vpow.pop %v746
    %v748 = vmul.f32 %v657, 1.442695
    %v749 = vpow.pop %v748
    %v750 = vmul.f32 %v658, 1.442695
    %v751 = vpow.pop %v750
    %v752 = vmul.f32 %v659, 1.442695
    %v753 = vpow.pop %v752
    %v754 = vmul.f32 %v660, 1.442695
    %v755 = vpow.pop %v754
    %v756 = vmul.f32 %v661, 1.442695
    %v757 = vpow.pop %v756
    %v758 = vmul.f32 %v662, 1.442695
    %v759 = vpow.pop %v758
    %v760 = vmul.f32 %v663, 1.442695
    %v761 = vpow.pop %v760
    %v762 = vmul.f32 %v664, 1.442695
    %v763 = vpow.pop %v762
    %v764 = vmul.f32 %v665, 1.442695
    %v765 = vpow.pop %v764
    %v766 = vmul.f32 %v666, 1.442695
    %v767 = vpow.pop %v766
    %v768 = vmul.f32 %v667, 1.442695
    %v769 = vpow.pop %v768
    %v770 = vmul.f32 %v668, 1.442695
    %v771 = vpow.pop %v770
    %v772 = vmul.f32 %v669, 1.442695
    %v773 = vpow.pop %v772
    %v774 = vmul.f32 %v670, 1.442695
    %v775 = vpow.pop %v774
    %v776 = vmul.f32 %v671, 1.442695
    %v777 = vpow.pop %v776
    %v778 = vmul.f32 %v672, 1.442695
    %v779 = vpow.pop %v778
    %v780 = vmul.f32 %v673, 1.442695
    %v781 = vpow.pop %v780
    %v782 = vmul.f32 %v674, 1.442695
    %v783 = vpow.pop %v782
    %v784 = vmul.f32 %v675, 1.442695
    %v785 = vpow.pop %v784
    %v786 = vmul.f32 %v676, 1.442695
    %v787 = vpow.pop %v786
    %v788 = vmul.f32 %v677, 1.442695
    %v789 = vpow.pop %v788
    %v790 = vmul.f32 %v678, 1.442695
    %v791 = vpow.pop %v790
    %v792 = vmul.f32 %v679, 1.442695
    %v793 = vpow.pop %v792
    %v794 = vmul.f32 %v680, 1.442695
    %v795 = vpow.pop %v794
    %v796 = vmul.f32 %v681, 1.442695
    %v797 = vpow.pop %v796
    %v798 = vmul.f32 %v682, 1.442695
    %v799 = vpow.pop %v798
    %v800 = vmul.f32 %v683, 1.442695
    %v801 = vpow.pop %v800
    %v802 = vmul.f32 %v684, 1.442695
    %v803 = vpow.pop %v802
    %v804 = vmul.f32 %v685, 1.442695
    %v805 = vpow.pop %v804
    %v806 = vmul.f32 %v686, 1.442695
    %v807 = vpow.pop %v806
    %v808 = vmul.f32 %v687, 1.442695
    %v809 = vpow.pop %v808
    %v810 = vmul.f32 %v688, 1.442695
    %v811 = vpow.pop %v810
    %v812 = vmul.f32 %v689, 1.442695
    %v813 = vpow.pop %v812
    %v814 = vmul.f32 %v690, 1.442695
    %v815 = vpow.pop %v814
    %v816 = vmul.f32 %v691, 1.442695
    %v817 = vpow.pop %v816
    %v818 = vmul.f32 %v692, 1.442695
    %v819 = vpow.pop %v818
    %v820 = vmul.f32 %v693, 1.442695
    %v821 = vpow.pop %v820
    %v822 = vmul.f32 %v694, 1.442695
    %v823 = vpow.pop %v822
    %v824 = vmul.f32 %v695, 1.442695
    %v825 = vpow.pop %v824
    %v826 = vmul.f32 %v696, 1.442695
    %v827 = vpow.pop %v826
    %v828 = vmul.f32 %v697, 1.442695
    %v829 = vpow.pop %v828
    %v830 = vmul.f32 %v698, 1.442695
    %v831 = vpow.pop %v830
    %v832 = vmul.f32 %v699, 1.442695
    %v833 = vpow.pop %v832
    %v834 = vmul.f32 %v700, 1.442695
    %v835 = vpow.pop %v834
    %v836 = vmul.f32 %v701, 1.442695
    %v837 = vpow.pop %v836
    %v838 = vsel %vm429, %v703, 0.0
    %839 = vadd.xlane.f32.xlu0 %v838
    %v840 = vpop.xlane.xlu0 %839
    %v841 = vsel %vm429, %v705, 0.0
    %842 = vadd.xlane.f32.xlu0 %v841
    %v843 = vpop.xlane.xlu0 %842
    %v844 = vsel %vm429, %v707, 0.0
    %845 = vadd.xlane.f32.xlu0 %v844
    %v846 = vpop.xlane.xlu0 %845
    %v847 = vsel %vm429, %v709, 0.0
    %848 = vadd.xlane.f32.xlu0 %v847
    %v849 = vpop.xlane.xlu0 %848
    %v850 = vsel %vm429, %v711, 0.0
    %851 = vadd.xlane.f32.xlu0 %v850
    %v852 = vpop.xlane.xlu0 %851
    %v853 = vsel %vm429, %v713, 0.0
    %854 = vadd.xlane.f32.xlu0 %v853
    %v855 = vpop.xlane.xlu0 %854
    %v856 = vsel %vm429, %v715, 0.0
    %857 = vadd.xlane.f32.xlu0 %v856
    %v858 = vpop.xlane.xlu0 %857
    %v859 = vsel %vm429, %v717, 0.0
    %860 = vadd.xlane.f32.xlu0 %v859
    %v861 = vpop.xlane.xlu0 %860
    %v862 = vsel %vm429, %v719, 0.0
    %863 = vadd.xlane.f32.xlu0 %v862
    %v864 = vpop.xlane.xlu0 %863
    %v865 = vsel %vm429, %v721, 0.0
    %866 = vadd.xlane.f32.xlu0 %v865
    %v867 = vpop.xlane.xlu0 %866
    %v868 = vsel %vm429, %v723, 0.0
    %869 = vadd.xlane.f32.xlu0 %v868
    %v870 = vpop.xlane.xlu0 %869
    %v871 = vsel %vm429, %v725, 0.0
    %872 = vadd.xlane.f32.xlu0 %v871
    %v873 = vpop.xlane.xlu0 %872
    %v874 = vsel %vm429, %v727, 0.0
    %875 = vadd.xlane.f32.xlu0 %v874
    %v876 = vpop.xlane.xlu0 %875
    %v877 = vsel %vm429, %v729, 0.0
    %878 = vadd.xlane.f32.xlu0 %v877
    %v879 = vpop.xlane.xlu0 %878
    %v880 = vsel %vm429, %v731, 0.0
    %881 = vadd.xlane.f32.xlu0 %v880
    %v882 = vpop.xlane.xlu0 %881
    %v883 = vsel %vm429, %v733, 0.0
    %884 = vadd.xlane.f32.xlu0 %v883
    %v885 = vpop.xlane.xlu0 %884
    %v886 = vsel %vm429, %v735, 0.0
    %887 = vadd.xlane.f32.xlu0 %v886
    %v888 = vpop.xlane.xlu0 %887
    %v889 = vsel %vm429, %v737, 0.0
    %890 = vadd.xlane.f32.xlu0 %v889
    %v891 = vpop.xlane.xlu0 %890
    %v892 = vsel %vm429, %v739, 0.0
    %893 = vadd.xlane.f32.xlu0 %v892
    %v894 = vpop.xlane.xlu0 %893
    %v895 = vsel %vm429, %v741, 0.0
    %896 = vadd.xlane.f32.xlu0 %v895
    %v897 = vpop.xlane.xlu0 %896
    %v898 = vsel %vm429, %v743, 0.0
    %899 = vadd.xlane.f32.xlu0 %v898
    %v900 = vpop.xlane.xlu0 %899
    %v901 = vsel %vm429, %v745, 0.0
    %902 = vadd.xlane.f32.xlu0 %v901
    %v903 = vpop.xlane.xlu0 %902
    %v904 = vsel %vm429, %v747, 0.0
    %905 = vadd.xlane.f32.xlu0 %v904
    %v906 = vpop.xlane.xlu0 %905
    %v907 = vsel %vm429, %v749, 0.0
    %908 = vadd.xlane.f32.xlu0 %v907
    %v909 = vpop.xlane.xlu0 %908
    %v910 = vsel %vm429, %v751, 0.0
    %911 = vadd.xlane.f32.xlu0 %v910
    %v912 = vpop.xlane.xlu0 %911
    %v913 = vsel %vm429, %v753, 0.0
    %914 = vadd.xlane.f32.xlu0 %v913
    %v915 = vpop.xlane.xlu0 %914
    %v916 = vsel %vm429, %v755, 0.0
    %917 = vadd.xlane.f32.xlu0 %v916
    %v918 = vpop.xlane.xlu0 %917
    %v919 = vsel %vm429, %v757, 0.0
    %920 = vadd.xlane.f32.xlu0 %v919
    %v921 = vpop.xlane.xlu0 %920
    %v922 = vsel %vm429, %v759, 0.0
    %923 = vadd.xlane.f32.xlu0 %v922
    %v924 = vpop.xlane.xlu0 %923
    %v925 = vsel %vm429, %v761, 0.0
    %926 = vadd.xlane.f32.xlu0 %v925
    %v927 = vpop.xlane.xlu0 %926
    %v928 = vsel %vm429, %v763, 0.0
    %929 = vadd.xlane.f32.xlu0 %v928
    %v930 = vpop.xlane.xlu0 %929
    %v931 = vsel %vm429, %v765, 0.0
    %932 = vadd.xlane.f32.xlu0 %v931
    %v933 = vpop.xlane.xlu0 %932
    %v934 = vsel %vm429, %v767, 0.0
    %935 = vadd.xlane.f32.xlu0 %v934
    %v936 = vpop.xlane.xlu0 %935
    %v937 = vsel %vm429, %v769, 0.0
    %938 = vadd.xlane.f32.xlu0 %v937
    %v939 = vpop.xlane.xlu0 %938
    %v940 = vsel %vm429, %v771, 0.0
    %941 = vadd.xlane.f32.xlu0 %v940
    %v942 = vpop.xlane.xlu0 %941
    %v943 = vsel %vm429, %v773, 0.0
    %944 = vadd.xlane.f32.xlu0 %v943
    %v945 = vpop.xlane.xlu0 %944
    %v946 = vsel %vm429, %v775, 0.0
    %947 = vadd.xlane.f32.xlu0 %v946
    %v948 = vpop.xlane.xlu0 %947
    %v949 = vsel %vm429, %v777, 0.0
    %950 = vadd.xlane.f32.xlu0 %v949
    %v951 = vpop.xlane.xlu0 %950
    %v952 = vsel %vm429, %v779, 0.0
    %953 = vadd.xlane.f32.xlu0 %v952
    %v954 = vpop.xlane.xlu0 %953
    %v955 = vsel %vm429, %v781, 0.0
    %956 = vadd.xlane.f32.xlu0 %v955
    %v957 = vpop.xlane.xlu0 %956
    %v958 = vsel %vm429, %v783, 0.0
    %959 = vadd.xlane.f32.xlu0 %v958
    %v960 = vpop.xlane.xlu0 %959
    %v961 = vsel %vm429, %v785, 0.0
    %962 = vadd.xlane.f32.xlu0 %v961
    %v963 = vpop.xlane.xlu0 %962
    %v964 = vsel %vm429, %v787, 0.0
    %965 = vadd.xlane.f32.xlu0 %v964
    %v966 = vpop.xlane.xlu0 %965
    %v967 = vsel %vm429, %v789, 0.0
    %968 = vadd.xlane.f32.xlu0 %v967
    %v969 = vpop.xlane.xlu0 %968
    %v970 = vsel %vm429, %v791, 0.0
    %971 = vadd.xlane.f32.xlu0 %v970
    %v972 = vpop.xlane.xlu0 %971
    %v973 = vsel %vm429, %v793, 0.0
    %974 = vadd.xlane.f32.xlu0 %v973
    %v975 = vpop.xlane.xlu0 %974
    %v976 = vsel %vm429, %v795, 0.0
    %977 = vadd.xlane.f32.xlu0 %v976
    %v978 = vpop.xlane.xlu0 %977
    %v979 = vsel %vm429, %v797, 0.0
    %980 = vadd.xlane.f32.xlu0 %v979
    %v981 = vpop.xlane.xlu0 %980
    %v982 = vsel %vm429, %v799, 0.0
    %983 = vadd.xlane.f32.xlu0 %v982
    %v984 = vpop.xlane.xlu0 %983
    %v985 = vsel %vm429, %v801, 0.0
    %986 = vadd.xlane.f32.xlu0 %v985
    %v987 = vpop.xlane.xlu0 %986
    %v988 = vsel %vm429, %v803, 0.0
    %989 = vadd.xlane.f32.xlu0 %v988
    %v990 = vpop.xlane.xlu0 %989
    %v991 = vsel %vm429, %v805, 0.0
    %992 = vadd.xlane.f32.xlu0 %v991
    %v993 = vpop.xlane.xlu0 %992
    %v994 = vsel %vm429, %v807, 0.0
    %995 = vadd.xlane.f32.xlu0 %v994
    %v996 = vpop.xlane.xlu0 %995
    %v997 = vsel %vm429, %v809, 0.0
    %998 = vadd.xlane.f32.xlu0 %v997
    %v999 = vpop.xlane.xlu0 %998
    %v1000 = vsel %vm429, %v811, 0.0
    %1001 = vadd.xlane.f32.xlu0 %v1000
    %v1002 = vpop.xlane.xlu0 %1001
    %v1003 = vsel %vm429, %v813, 0.0
    %1004 = vadd.xlane.f32.xlu0 %v1003
    %v1005 = vpop.xlane.xlu0 %1004
    %v1006 = vsel %vm429, %v815, 0.0
    %1007 = vadd.xlane.f32.xlu0 %v1006
    %v1008 = vpop.xlane.xlu0 %1007
    %v1009 = vsel %vm429, %v817, 0.0
    %1010 = vadd.xlane.f32.xlu0 %v1009
    %v1011 = vpop.xlane.xlu0 %1010
    %v1012 = vsel %vm429, %v819, 0.0
    %1013 = vadd.xlane.f32.xlu0 %v1012
    %v1014 = vpop.xlane.xlu0 %1013
    %v1015 = vsel %vm429, %v821, 0.0
    %1016 = vadd.xlane.f32.xlu0 %v1015
    %v1017 = vpop.xlane.xlu0 %1016
    %v1018 = vsel %vm429, %v823, 0.0
    %1019 = vadd.xlane.f32.xlu0 %v1018
    %v1020 = vpop.xlane.xlu0 %1019
    %v1021 = vsel %vm429, %v825, 0.0
    %1022 = vadd.xlane.f32.xlu0 %v1021
    %v1023 = vpop.xlane.xlu0 %1022
    %v1024 = vsel %vm429, %v827, 0.0
    %1025 = vadd.xlane.f32.xlu0 %v1024
    %v1026 = vpop.xlane.xlu0 %1025
    %v1027 = vsel %vm429, %v829, 0.0
    %1028 = vadd.xlane.f32.xlu0 %v1027
    %v1029 = vpop.xlane.xlu0 %1028
    %v1030 = vsel %vm429, %v831, 0.0
    %1031 = vadd.xlane.f32.xlu0 %v1030
    %v1032 = vpop.xlane.xlu0 %1031
    %v1033 = vsel %vm429, %v833, 0.0
    %1034 = vadd.xlane.f32.xlu0 %v1033
    %v1035 = vpop.xlane.xlu0 %1034
    %v1036 = vsel %vm429, %v835, 0.0
    %1037 = vadd.xlane.f32.xlu0 %v1036
    %v1038 = vpop.xlane.xlu0 %1037
    %v1039 = vsel %vm429, %v837, 0.0
    %1040 = vadd.xlane.f32.xlu0 %v1039
    %v1041 = vpop.xlane.xlu0 %1040
    %v1042 = vlog2.pop %v840
    %v1043 = vmul.f32 %v1042, 0.6931472
    %v1044 = vlog2.pop %v843
    %v1045 = vmul.f32 %v1044, 0.6931472
    %v1046 = vlog2.pop %v846
    %v1047 = vmul.f32 %v1046, 0.6931472
    %v1048 = vlog2.pop %v849
    %v1049 = vmul.f32 %v1048, 0.6931472
    %v1050 = vlog2.pop %v852
    %v1051 = vmul.f32 %v1050, 0.6931472
    %v1052 = vlog2.pop %v855
    %v1053 = vmul.f32 %v1052, 0.6931472
    %v1054 = vlog2.pop %v858
    %v1055 = vmul.f32 %v1054, 0.6931472
    %v1056 = vlog2.pop %v861
    %v1057 = vmul.f32 %v1056, 0.6931472
    %v1058 = vlog2.pop %v864
    %v1059 = vmul.f32 %v1058, 0.6931472
    %v1060 = vlog2.pop %v867
    %v1061 = vmul.f32 %v1060, 0.6931472
    %v1062 = vlog2.pop %v870
    %v1063 = vmul.f32 %v1062, 0.6931472
    %v1064 = vlog2.pop %v873
    %v1065 = vmul.f32 %v1064, 0.6931472
    %v1066 = vlog2.pop %v876
    %v1067 = vmul.f32 %v1066, 0.6931472
    %v1068 = vlog2.pop %v879
    %v1069 = vmul.f32 %v1068, 0.6931472
    %v1070 = vlog2.pop %v882
    %v1071 = vmul.f32 %v1070, 0.6931472
    %v1072 = vlog2.pop %v885
    %v1073 = vmul.f32 %v1072, 0.6931472
    %v1074 = vlog2.pop %v888
    %v1075 = vmul.f32 %v1074, 0.6931472
    %v1076 = vlog2.pop %v891
    %v1077 = vmul.f32 %v1076, 0.6931472
    %v1078 = vlog2.pop %v894
    %v1079 = vmul.f32 %v1078, 0.6931472
    %v1080 = vlog2.pop %v897
    %v1081 = vmul.f32 %v1080, 0.6931472
    %v1082 = vlog2.pop %v900
    %v1083 = vmul.f32 %v1082, 0.6931472
    %v1084 = vlog2.pop %v903
    %v1085 = vmul.f32 %v1084, 0.6931472
    %v1086 = vlog2.pop %v906
    %v1087 = vmul.f32 %v1086, 0.6931472
    %v1088 = vlog2.pop %v909
    %v1089 = vmul.f32 %v1088, 0.6931472
    %v1090 = vlog2.pop %v912
    %v1091 = vmul.f32 %v1090, 0.6931472
    %v1092 = vlog2.pop %v915
    %v1093 = vmul.f32 %v1092, 0.6931472
    %v1094 = vlog2.pop %v918
    %v1095 = vmul.f32 %v1094, 0.6931472
    %v1096 = vlog2.pop %v921
    %v1097 = vmul.f32 %v1096, 0.6931472
    %v1098 = vlog2.pop %v924
    %v1099 = vmul.f32 %v1098, 0.6931472
    %v1100 = vlog2.pop %v927
    %v1101 = vmul.f32 %v1100, 0.6931472
    %v1102 = vlog2.pop %v930
    %v1103 = vmul.f32 %v1102, 0.6931472
    %v1104 = vlog2.pop %v933
    %v1105 = vmul.f32 %v1104, 0.6931472
    %v1106 = vlog2.pop %v936
    %v1107 = vmul.f32 %v1106, 0.6931472
    %v1108 = vlog2.pop %v939
    %v1109 = vmul.f32 %v1108, 0.6931472
    %v1110 = vlog2.pop %v942
    %v1111 = vmul.f32 %v1110, 0.6931472
    %v1112 = vlog2.pop %v945
    %v1113 = vmul.f32 %v1112, 0.6931472
    %v1114 = vlog2.pop %v948
    %v1115 = vmul.f32 %v1114, 0.6931472
    %v1116 = vlog2.pop %v951
    %v1117 = vmul.f32 %v1116, 0.6931472
    %v1118 = vlog2.pop %v954
    %v1119 = vmul.f32 %v1118, 0.6931472
    %v1120 = vlog2.pop %v957
    %v1121 = vmul.f32 %v1120, 0.6931472
    %v1122 = vlog2.pop %v960
    %v1123 = vmul.f32 %v1122, 0.6931472
    %v1124 = vlog2.pop %v963
    %v1125 = vmul.f32 %v1124, 0.6931472
    %v1126 = vlog2.pop %v966
    %v1127 = vmul.f32 %v1126, 0.6931472
    %v1128 = vlog2.pop %v969
    %v1129 = vmul.f32 %v1128, 0.6931472
    %v1130 = vlog2.pop %v972
    %v1131 = vmul.f32 %v1130, 0.6931472
    %v1132 = vlog2.pop %v975
    %v1133 = vmul.f32 %v1132, 0.6931472
    %v1134 = vlog2.pop %v978
    %v1135 = vmul.f32 %v1134, 0.6931472
    %v1136 = vlog2.pop %v981
    %v1137 = vmul.f32 %v1136, 0.6931472
    %v1138 = vlog2.pop %v984
    %v1139 = vmul.f32 %v1138, 0.6931472
    %v1140 = vlog2.pop %v987
    %v1141 = vmul.f32 %v1140, 0.6931472
    %v1142 = vlog2.pop %v990
    %v1143 = vmul.f32 %v1142, 0.6931472
    %v1144 = vlog2.pop %v993
    %v1145 = vmul.f32 %v1144, 0.6931472
    %v1146 = vlog2.pop %v996
    %v1147 = vmul.f32 %v1146, 0.6931472
    %v1148 = vlog2.pop %v999
    %v1149 = vmul.f32 %v1148, 0.6931472
    %v1150 = vlog2.pop %v1002
    %v1151 = vmul.f32 %v1150, 0.6931472
    %v1152 = vlog2.pop %v1005
    %v1153 = vmul.f32 %v1152, 0.6931472
    %v1154 = vlog2.pop %v1008
    %v1155 = vmul.f32 %v1154, 0.6931472
    %v1156 = vlog2.pop %v1011
    %v1157 = vmul.f32 %v1156, 0.6931472
    %v1158 = vlog2.pop %v1014
    %v1159 = vmul.f32 %v1158, 0.6931472
    %v1160 = vlog2.pop %v1017
    %v1161 = vmul.f32 %v1160, 0.6931472
    %v1162 = vlog2.pop %v1020
    %v1163 = vmul.f32 %v1162, 0.6931472
    %v1164 = vlog2.pop %v1023
    %v1165 = vmul.f32 %v1164, 0.6931472
    %v1166 = vlog2.pop %v1026
    %v1167 = vmul.f32 %v1166, 0.6931472
    %v1168 = vlog2.pop %v1029
    %v1169 = vmul.f32 %v1168, 0.6931472
    %v1170 = vlog2.pop %v1032
    %v1171 = vmul.f32 %v1170, 0.6931472
    %v1172 = vlog2.pop %v1035
    %v1173 = vmul.f32 %v1172, 0.6931472
    %v1174 = vlog2.pop %v1038
    %v1175 = vmul.f32 %v1174, 0.6931472
    %v1176 = vlog2.pop %v1041
    %v1177 = vmul.f32 %v1176, 0.6931472
    %v1178 = vadd.f32 %v432, %v1043
    %v1179 = vadd.f32 %v435, %v1045
    %v1180 = vadd.f32 %v438, %v1047
    %v1181 = vadd.f32 %v441, %v1049
    %v1182 = vadd.f32 %v444, %v1051
    %v1183 = vadd.f32 %v447, %v1053
    %v1184 = vadd.f32 %v450, %v1055
    %v1185 = vadd.f32 %v453, %v1057
    %v1186 = vadd.f32 %v456, %v1059
    %v1187 = vadd.f32 %v459, %v1061
    %v1188 = vadd.f32 %v462, %v1063
    %v1189 = vadd.f32 %v465, %v1065
    %v1190 = vadd.f32 %v468, %v1067
    %v1191 = vadd.f32 %v471, %v1069
    %v1192 = vadd.f32 %v474, %v1071
    %v1193 = vadd.f32 %v477, %v1073
    %v1194 = vadd.f32 %v480, %v1075
    %v1195 = vadd.f32 %v483, %v1077
    %v1196 = vadd.f32 %v486, %v1079
    %v1197 = vadd.f32 %v489, %v1081
    %v1198 = vadd.f32 %v492, %v1083
    %v1199 = vadd.f32 %v495, %v1085
    %v1200 = vadd.f32 %v498, %v1087
    %v1201 = vadd.f32 %v501, %v1089
    %v1202 = vadd.f32 %v504, %v1091
    %v1203 = vadd.f32 %v507, %v1093
    %v1204 = vadd.f32 %v510, %v1095
    %v1205 = vadd.f32 %v513, %v1097
    %v1206 = vadd.f32 %v516, %v1099
    %v1207 = vadd.f32 %v519, %v1101
    %v1208 = vadd.f32 %v522, %v1103
    %v1209 = vadd.f32 %v525, %v1105
    %v1210 = vadd.f32 %v528, %v1107
    %v1211 = vadd.f32 %v531, %v1109
    %v1212 = vadd.f32 %v534, %v1111
    %v1213 = vadd.f32 %v537, %v1113
    %v1214 = vadd.f32 %v540, %v1115
    %v1215 = vadd.f32 %v543, %v1117
    %v1216 = vadd.f32 %v546, %v1119
    %v1217 = vadd.f32 %v549, %v1121
    %v1218 = vadd.f32 %v552, %v1123
    %v1219 = vadd.f32 %v555, %v1125
    %v1220 = vadd.f32 %v558, %v1127
    %v1221 = vadd.f32 %v561, %v1129
    %v1222 = vadd.f32 %v564, %v1131
    %v1223 = vadd.f32 %v567, %v1133
    %v1224 = vadd.f32 %v570, %v1135
    %v1225 = vadd.f32 %v573, %v1137
    %v1226 = vadd.f32 %v576, %v1139
    %v1227 = vadd.f32 %v579, %v1141
    %v1228 = vadd.f32 %v582, %v1143
    %v1229 = vadd.f32 %v585, %v1145
    %v1230 = vadd.f32 %v588, %v1147
    %v1231 = vadd.f32 %v591, %v1149
    %v1232 = vadd.f32 %v594, %v1151
    %v1233 = vadd.f32 %v597, %v1153
    %v1234 = vadd.f32 %v600, %v1155
    %v1235 = vadd.f32 %v603, %v1157
    %v1236 = vadd.f32 %v606, %v1159
    %v1237 = vadd.f32 %v609, %v1161
    %v1238 = vadd.f32 %v612, %v1163
    %v1239 = vadd.f32 %v615, %v1165
    %v1240 = vadd.f32 %v618, %v1167
    %v1241 = vadd.f32 %v621, %v1169
    %v1242 = vadd.f32 %v624, %v1171
    %v1243 = vadd.f32 %v627, %v1173
    %v1244 = vadd.f32 %v630, %v1175
    %v1245 = vadd.f32 %v633, %v1177
    %v1246 = vlaneseq
    %v1247 = vand.u32 %v1246, 127
    %1248 = vset.pattern.permute.xlu0 0
    %1249 = vperm.xlu0 %1248, %v293
    %v1250 = vpop.permute.xlu0 %1249
    %1251 = vset.pattern.permute.xlu0 0
    %1252 = vperm.xlu0 %1251, %v294
    %v1253 = vpop.permute.xlu0 %1252
    %1254 = vset.pattern.permute.xlu0 0
    %1255 = vperm.xlu0 %1254, %v295
    %v1256 = vpop.permute.xlu0 %1255
    %1257 = vset.pattern.permute.xlu0 0
    %1258 = vperm.xlu0 %1257, %v296
    %v1259 = vpop.permute.xlu0 %1258
    %1260 = vset.pattern.permute.xlu0 0
    %1261 = vperm.xlu0 %1260, %v297
    %v1262 = vpop.permute.xlu0 %1261
    %1263 = vset.pattern.permute.xlu0 0
    %1264 = vperm.xlu0 %1263, %v298
    %v1265 = vpop.permute.xlu0 %1264
    %1266 = vset.pattern.permute.xlu0 0
    %1267 = vperm.xlu0 %1266, %v299
    %v1268 = vpop.permute.xlu0 %1267
    %1269 = vset.pattern.permute.xlu0 0
    %1270 = vperm.xlu0 %1269, %v300
    %v1271 = vpop.permute.xlu0 %1270
    %1272 = vset.pattern.permute.xlu0 0
    %1273 = vperm.xlu0 %1272, %v301
    %v1274 = vpop.permute.xlu0 %1273
    %1275 = vset.pattern.permute.xlu0 0
    %1276 = vperm.xlu0 %1275, %v302
    %v1277 = vpop.permute.xlu0 %1276
    %1278 = vset.pattern.permute.xlu0 0
    %1279 = vperm.xlu0 %1278, %v303
    %v1280 = vpop.permute.xlu0 %1279
    %1281 = vset.pattern.permute.xlu0 0
    %1282 = vperm.xlu0 %1281, %v304
    %v1283 = vpop.permute.xlu0 %1282
    %1284 = vset.pattern.permute.xlu0 0
    %1285 = vperm.xlu0 %1284, %v305
    %v1286 = vpop.permute.xlu0 %1285
    %1287 = vset.pattern.permute.xlu0 0
    %1288 = vperm.xlu0 %1287, %v306
    %v1289 = vpop.permute.xlu0 %1288
    %1290 = vset.pattern.permute.xlu0 0
    %1291 = vperm.xlu0 %1290, %v307
    %v1292 = vpop.permute.xlu0 %1291
    %1293 = vset.pattern.permute.xlu0 0
    %1294 = vperm.xlu0 %1293, %v308
    %v1295 = vpop.permute.xlu0 %1294
    %1296 = vset.pattern.permute.xlu0 0
    %1297 = vperm.xlu0 %1296, %v309
    %v1298 = vpop.permute.xlu0 %1297
    %1299 = vset.pattern.permute.xlu0 0
    %1300 = vperm.xlu0 %1299, %v310
    %v1301 = vpop.permute.xlu0 %1300
    %1302 = vset.pattern.permute.xlu0 0
    %1303 = vperm.xlu0 %1302, %v311
    %v1304 = vpop.permute.xlu0 %1303
    %1305 = vset.pattern.permute.xlu0 0
    %1306 = vperm.xlu0 %1305, %v312
    %v1307 = vpop.permute.xlu0 %1306
    %1308 = vset.pattern.permute.xlu0 0
    %1309 = vperm.xlu0 %1308, %v313
    %v1310 = vpop.permute.xlu0 %1309
    %1311 = vset.pattern.permute.xlu0 0
    %1312 = vperm.xlu0 %1311, %v314
    %v1313 = vpop.permute.xlu0 %1312
    %1314 = vset.pattern.permute.xlu0 0
    %1315 = vperm.xlu0 %1314, %v315
    %v1316 = vpop.permute.xlu0 %1315
    %1317 = vset.pattern.permute.xlu0 0
    %1318 = vperm.xlu0 %1317, %v316
    %v1319 = vpop.permute.xlu0 %1318
    %1320 = vset.pattern.permute.xlu0 0
    %1321 = vperm.xlu0 %1320, %v317
    %v1322 = vpop.permute.xlu0 %1321
    %1323 = vset.pattern.permute.xlu0 0
    %1324 = vperm.xlu0 %1323, %v318
    %v1325 = vpop.permute.xlu0 %1324
    %1326 = vset.pattern.permute.xlu0 0
    %1327 = vperm.xlu0 %1326, %v319
    %v1328 = vpop.permute.xlu0 %1327
    %1329 = vset.pattern.permute.xlu0 0
    %1330 = vperm.xlu0 %1329, %v320
    %v1331 = vpop.permute.xlu0 %1330
    %1332 = vset.pattern.permute.xlu0 0
    %1333 = vperm.xlu0 %1332, %v321
    %v1334 = vpop.permute.xlu0 %1333
    %1335 = vset.pattern.permute.xlu0 0
    %1336 = vperm.xlu0 %1335, %v322
    %v1337 = vpop.permute.xlu0 %1336
    %1338 = vset.pattern.permute.xlu0 0
    %1339 = vperm.xlu0 %1338, %v323
    %v1340 = vpop.permute.xlu0 %1339
    %1341 = vset.pattern.permute.xlu0 0
    %1342 = vperm.xlu0 %1341, %v324
    %v1343 = vpop.permute.xlu0 %1342
    %1344 = vset.pattern.permute.xlu0 0
    %1345 = vperm.xlu0 %1344, %v325
    %v1346 = vpop.permute.xlu0 %1345
    %1347 = vset.pattern.permute.xlu0 0
    %1348 = vperm.xlu0 %1347, %v326
    %v1349 = vpop.permute.xlu0 %1348
    %1350 = vset.pattern.permute.xlu0 0
    %1351 = vperm.xlu0 %1350, %v327
    %v1352 = vpop.permute.xlu0 %1351
    %1353 = vset.pattern.permute.xlu0 0
    %1354 = vperm.xlu0 %1353, %v328
    %v1355 = vpop.permute.xlu0 %1354
    %1356 = vset.pattern.permute.xlu0 0
    %1357 = vperm.xlu0 %1356, %v329
    %v1358 = vpop.permute.xlu0 %1357
    %1359 = vset.pattern.permute.xlu0 0
    %1360 = vperm.xlu0 %1359, %v330
    %v1361 = vpop.permute.xlu0 %1360
    %1362 = vset.pattern.permute.xlu0 0
    %1363 = vperm.xlu0 %1362, %v331
    %v1364 = vpop.permute.xlu0 %1363
    %1365 = vset.pattern.permute.xlu0 0
    %1366 = vperm.xlu0 %1365, %v332
    %v1367 = vpop.permute.xlu0 %1366
    %1368 = vset.pattern.permute.xlu0 0
    %1369 = vperm.xlu0 %1368, %v333
    %v1370 = vpop.permute.xlu0 %1369
    %1371 = vset.pattern.permute.xlu0 0
    %1372 = vperm.xlu0 %1371, %v334
    %v1373 = vpop.permute.xlu0 %1372
    %1374 = vset.pattern.permute.xlu0 0
    %1375 = vperm.xlu0 %1374, %v335
    %v1376 = vpop.permute.xlu0 %1375
    %1377 = vset.pattern.permute.xlu0 0
    %1378 = vperm.xlu0 %1377, %v336
    %v1379 = vpop.permute.xlu0 %1378
    %1380 = vset.pattern.permute.xlu0 0
    %1381 = vperm.xlu0 %1380, %v337
    %v1382 = vpop.permute.xlu0 %1381
    %1383 = vset.pattern.permute.xlu0 0
    %1384 = vperm.xlu0 %1383, %v338
    %v1385 = vpop.permute.xlu0 %1384
    %1386 = vset.pattern.permute.xlu0 0
    %1387 = vperm.xlu0 %1386, %v339
    %v1388 = vpop.permute.xlu0 %1387
    %1389 = vset.pattern.permute.xlu0 0
    %1390 = vperm.xlu0 %1389, %v340
    %v1391 = vpop.permute.xlu0 %1390
    %1392 = vset.pattern.permute.xlu0 0
    %1393 = vperm.xlu0 %1392, %v341
    %v1394 = vpop.permute.xlu0 %1393
    %1395 = vset.pattern.permute.xlu0 0
    %1396 = vperm.xlu0 %1395, %v342
    %v1397 = vpop.permute.xlu0 %1396
    %1398 = vset.pattern.permute.xlu0 0
    %1399 = vperm.xlu0 %1398, %v343
    %v1400 = vpop.permute.xlu0 %1399
    %1401 = vset.pattern.permute.xlu0 0
    %1402 = vperm.xlu0 %1401, %v344
    %v1403 = vpop.permute.xlu0 %1402
    %1404 = vset.pattern.permute.xlu0 0
    %1405 = vperm.xlu0 %1404, %v345
    %v1406 = vpop.permute.xlu0 %1405
    %1407 = vset.pattern.permute.xlu0 0
    %1408 = vperm.xlu0 %1407, %v346
    %v1409 = vpop.permute.xlu0 %1408
    %1410 = vset.pattern.permute.xlu0 0
    %1411 = vperm.xlu0 %1410, %v347
    %v1412 = vpop.permute.xlu0 %1411
    %1413 = vset.pattern.permute.xlu0 0
    %1414 = vperm.xlu0 %1413, %v348
    %v1415 = vpop.permute.xlu0 %1414
    %1416 = vset.pattern.permute.xlu0 0
    %1417 = vperm.xlu0 %1416, %v349
    %v1418 = vpop.permute.xlu0 %1417
    %1419 = vset.pattern.permute.xlu0 0
    %1420 = vperm.xlu0 %1419, %v350
    %v1421 = vpop.permute.xlu0 %1420
    %1422 = vset.pattern.permute.xlu0 0
    %1423 = vperm.xlu0 %1422, %v351
    %v1424 = vpop.permute.xlu0 %1423
    %1425 = vset.pattern.permute.xlu0 0
    %1426 = vperm.xlu0 %1425, %v352
    %v1427 = vpop.permute.xlu0 %1426
    %1428 = vset.pattern.permute.xlu0 0
    %1429 = vperm.xlu0 %1428, %v353
    %v1430 = vpop.permute.xlu0 %1429
    %1431 = vset.pattern.permute.xlu0 0
    %1432 = vperm.xlu0 %1431, %v354
    %v1433 = vpop.permute.xlu0 %1432
    %1434 = vset.pattern.permute.xlu0 0
    %1435 = vperm.xlu0 %1434, %v355
    %v1436 = vpop.permute.xlu0 %1435
    %1437 = vset.pattern.permute.xlu0 0
    %1438 = vperm.xlu0 %1437, %v356
    %v1439 = vpop.permute.xlu0 %1438
    %1440 = vset.pattern.permute.xlu0 0
    %1441 = vperm.xlu0 %1440, %v357
    %v1442 = vpop.permute.xlu0 %1441
    %1443 = vset.pattern.permute.xlu0 0
    %1444 = vperm.xlu0 %1443, %v358
    %v1445 = vpop.permute.xlu0 %1444
    %1446 = vset.pattern.permute.xlu0 0
    %1447 = vperm.xlu0 %1446, %v359
    %v1448 = vpop.permute.xlu0 %1447
    %1449 = vset.pattern.permute.xlu0 0
    %1450 = vperm.xlu0 %1449, %v360
    %v1451 = vpop.permute.xlu0 %1450
    %vm1452 = vcmp.eq.s32.totalorder %v1247, %v1250
    %vm1453 = vcmp.eq.s32.totalorder %v1247, %v1253
    %vm1454 = vcmp.eq.s32.totalorder %v1247, %v1256
    %vm1455 = vcmp.eq.s32.totalorder %v1247, %v1259
    %vm1456 = vcmp.eq.s32.totalorder %v1247, %v1262
    %vm1457 = vcmp.eq.s32.totalorder %v1247, %v1265
    %vm1458 = vcmp.eq.s32.totalorder %v1247, %v1268
    %vm1459 = vcmp.eq.s32.totalorder %v1247, %v1271
    %vm1460 = vcmp.eq.s32.totalorder %v1247, %v1274
    %vm1461 = vcmp.eq.s32.totalorder %v1247, %v1277
    %vm1462 = vcmp.eq.s32.totalorder %v1247, %v1280
    %vm1463 = vcmp.eq.s32.totalorder %v1247, %v1283
    %vm1464 = vcmp.eq.s32.totalorder %v1247, %v1286
    %vm1465 = vcmp.eq.s32.totalorder %v1247, %v1289
    %vm1466 = vcmp.eq.s32.totalorder %v1247, %v1292
    %vm1467 = vcmp.eq.s32.totalorder %v1247, %v1295
    %vm1468 = vcmp.eq.s32.totalorder %v1247, %v1298
    %vm1469 = vcmp.eq.s32.totalorder %v1247, %v1301
    %vm1470 = vcmp.eq.s32.totalorder %v1247, %v1304
    %vm1471 = vcmp.eq.s32.totalorder %v1247, %v1307
    %vm1472 = vcmp.eq.s32.totalorder %v1247, %v1310
    %vm1473 = vcmp.eq.s32.totalorder %v1247, %v1313
    %vm1474 = vcmp.eq.s32.totalorder %v1247, %v1316
    %vm1475 = vcmp.eq.s32.totalorder %v1247, %v1319
    %vm1476 = vcmp.eq.s32.totalorder %v1247, %v1322
    %vm1477 = vcmp.eq.s32.totalorder %v1247, %v1325
    %vm1478 = vcmp.eq.s32.totalorder %v1247, %v1328
    %vm1479 = vcmp.eq.s32.totalorder %v1247, %v1331
    %vm1480 = vcmp.eq.s32.totalorder %v1247, %v1334
    %vm1481 = vcmp.eq.s32.totalorder %v1247, %v1337
    %vm1482 = vcmp.eq.s32.totalorder %v1247, %v1340
    %vm1483 = vcmp.eq.s32.totalorder %v1247, %v1343
    %vm1484 = vcmp.eq.s32.totalorder %v1247, %v1346
    %vm1485 = vcmp.eq.s32.totalorder %v1247, %v1349
    %vm1486 = vcmp.eq.s32.totalorder %v1247, %v1352
    %vm1487 = vcmp.eq.s32.totalorder %v1247, %v1355
    %vm1488 = vcmp.eq.s32.totalorder %v1247, %v1358
    %vm1489 = vcmp.eq.s32.totalorder %v1247, %v1361
    %vm1490 = vcmp.eq.s32.totalorder %v1247, %v1364
    %vm1491 = vcmp.eq.s32.totalorder %v1247, %v1367
    %vm1492 = vcmp.eq.s32.totalorder %v1247, %v1370
    %vm1493 = vcmp.eq.s32.totalorder %v1247, %v1373
    %vm1494 = vcmp.eq.s32.totalorder %v1247, %v1376
    %vm1495 = vcmp.eq.s32.totalorder %v1247, %v1379
    %vm1496 = vcmp.eq.s32.totalorder %v1247, %v1382
    %vm1497 = vcmp.eq.s32.totalorder %v1247, %v1385
    %vm1498 = vcmp.eq.s32.totalorder %v1247, %v1388
    %vm1499 = vcmp.eq.s32.totalorder %v1247, %v1391
    %vm1500 = vcmp.eq.s32.totalorder %v1247, %v1394
    %vm1501 = vcmp.eq.s32.totalorder %v1247, %v1397
    %vm1502 = vcmp.eq.s32.totalorder %v1247, %v1400
    %vm1503 = vcmp.eq.s32.totalorder %v1247, %v1403
    %vm1504 = vcmp.eq.s32.totalorder %v1247, %v1406
    %vm1505 = vcmp.eq.s32.totalorder %v1247, %v1409
    %vm1506 = vcmp.eq.s32.totalorder %v1247, %v1412
    %vm1507 = vcmp.eq.s32.totalorder %v1247, %v1415
    %vm1508 = vcmp.eq.s32.totalorder %v1247, %v1418
    %vm1509 = vcmp.eq.s32.totalorder %v1247, %v1421
    %vm1510 = vcmp.eq.s32.totalorder %v1247, %v1424
    %vm1511 = vcmp.eq.s32.totalorder %v1247, %v1427
    %vm1512 = vcmp.eq.s32.totalorder %v1247, %v1430
    %vm1513 = vcmp.eq.s32.totalorder %v1247, %v1433
    %vm1514 = vcmp.eq.s32.totalorder %v1247, %v1436
    %vm1515 = vcmp.eq.s32.totalorder %v1247, %v1439
    %vm1516 = vcmp.eq.s32.totalorder %v1247, %v1442
    %vm1517 = vcmp.eq.s32.totalorder %v1247, %v1445
    %vm1518 = vcmp.eq.s32.totalorder %v1247, %v1448
    %vm1519 = vcmp.eq.s32.totalorder %v1247, %v1451
    %v1520 = vsel %vm1452, %v21, 0.0
    %v1521 = vsel %vm1453, %v22, 0.0
    %v1522 = vsel %vm1454, %v23, 0.0
    %v1523 = vsel %vm1455, %v24, 0.0
    %v1524 = vsel %vm1456, %v25, 0.0
    %v1525 = vsel %vm1457, %v26, 0.0
    %v1526 = vsel %vm1458, %v27, 0.0
    %v1527 = vsel %vm1459, %v28, 0.0
    %v1528 = vsel %vm1460, %v29, 0.0
    %v1529 = vsel %vm1461, %v30, 0.0
    %v1530 = vsel %vm1462, %v31, 0.0
    %v1531 = vsel %vm1463, %v32, 0.0
    %v1532 = vsel %vm1464, %v33, 0.0
    %v1533 = vsel %vm1465, %v34, 0.0
    %v1534 = vsel %vm1466, %v35, 0.0
    %v1535 = vsel %vm1467, %v36, 0.0
    %v1536 = vsel %vm1468, %v37, 0.0
    %v1537 = vsel %vm1469, %v38, 0.0
    %v1538 = vsel %vm1470, %v39, 0.0
    %v1539 = vsel %vm1471, %v40, 0.0
    %v1540 = vsel %vm1472, %v41, 0.0
    %v1541 = vsel %vm1473, %v42, 0.0
    %v1542 = vsel %vm1474, %v43, 0.0
    %v1543 = vsel %vm1475, %v44, 0.0
    %v1544 = vsel %vm1476, %v45, 0.0
    %v1545 = vsel %vm1477, %v46, 0.0
    %v1546 = vsel %vm1478, %v47, 0.0
    %v1547 = vsel %vm1479, %v48, 0.0
    %v1548 = vsel %vm1480, %v49, 0.0
    %v1549 = vsel %vm1481, %v50, 0.0
    %v1550 = vsel %vm1482, %v51, 0.0
    %v1551 = vsel %vm1483, %v52, 0.0
    %v1552 = vsel %vm1484, %v53, 0.0
    %v1553 = vsel %vm1485, %v54, 0.0
    %v1554 = vsel %vm1486, %v55, 0.0
    %v1555 = vsel %vm1487, %v56, 0.0
    %v1556 = vsel %vm1488, %v57, 0.0
    %v1557 = vsel %vm1489, %v58, 0.0
    %v1558 = vsel %vm1490, %v59, 0.0
    %v1559 = vsel %vm1491, %v60, 0.0
    %v1560 = vsel %vm1492, %v61, 0.0
    %v1561 = vsel %vm1493, %v62, 0.0
    %v1562 = vsel %vm1494, %v63, 0.0
    %v1563 = vsel %vm1495, %v64, 0.0
    %v1564 = vsel %vm1496, %v65, 0.0
    %v1565 = vsel %vm1497, %v66, 0.0
    %v1566 = vsel %vm1498, %v67, 0.0
    %v1567 = vsel %vm1499, %v68, 0.0
    %v1568 = vsel %vm1500, %v69, 0.0
    %v1569 = vsel %vm1501, %v70, 0.0
    %v1570 = vsel %vm1502, %v71, 0.0
    %v1571 = vsel %vm1503, %v72, 0.0
    %v1572 = vsel %vm1504, %v73, 0.0
    %v1573 = vsel %vm1505, %v74, 0.0
    %v1574 = vsel %vm1506, %v75, 0.0
    %v1575 = vsel %vm1507, %v76, 0.0
    %v1576 = vsel %vm1508, %v77, 0.0
    %v1577 = vsel %vm1509, %v78, 0.0
    %v1578 = vsel %vm1510, %v79, 0.0
    %v1579 = vsel %vm1511, %v80, 0.0
    %v1580 = vsel %vm1512, %v81, 0.0
    %v1581 = vsel %vm1513, %v82, 0.0
    %v1582 = vsel %vm1514, %v83, 0.0
    %v1583 = vsel %vm1515, %v84, 0.0
    %v1584 = vsel %vm1516, %v85, 0.0
    %v1585 = vsel %vm1517, %v86, 0.0
    %v1586 = vsel %vm1518, %v87, 0.0
    %v1587 = vsel %vm1519, %v88, 0.0
    %v1588 = vsel %vm429, %v1520, 0.0
    %1589 = vadd.xlane.f32.xlu0 %v1588
    %v1590 = vpop.xlane.xlu0 %1589
    %v1591 = vsel %vm429, %v1521, 0.0
    %1592 = vadd.xlane.f32.xlu0 %v1591
    %v1593 = vpop.xlane.xlu0 %1592
    %v1594 = vsel %vm429, %v1522, 0.0
    %1595 = vadd.xlane.f32.xlu0 %v1594
    %v1596 = vpop.xlane.xlu0 %1595
    %v1597 = vsel %vm429, %v1523, 0.0
    %1598 = vadd.xlane.f32.xlu0 %v1597
    %v1599 = vpop.xlane.xlu0 %1598
    %v1600 = vsel %vm429, %v1524, 0.0
    %1601 = vadd.xlane.f32.xlu0 %v1600
    %v1602 = vpop.xlane.xlu0 %1601
    %v1603 = vsel %vm429, %v1525, 0.0
    %1604 = vadd.xlane.f32.xlu0 %v1603
    %v1605 = vpop.xlane.xlu0 %1604
    %v1606 = vsel %vm429, %v1526, 0.0
    %1607 = vadd.xlane.f32.xlu0 %v1606
    %v1608 = vpop.xlane.xlu0 %1607
    %v1609 = vsel %vm429, %v1527, 0.0
    %1610 = vadd.xlane.f32.xlu0 %v1609
    %v1611 = vpop.xlane.xlu0 %1610
    %v1612 = vsel %vm429, %v1528, 0.0
    %1613 = vadd.xlane.f32.xlu0 %v1612
    %v1614 = vpop.xlane.xlu0 %1613
    %v1615 = vsel %vm429, %v1529, 0.0
    %1616 = vadd.xlane.f32.xlu0 %v1615
    %v1617 = vpop.xlane.xlu0 %1616
    %v1618 = vsel %vm429, %v1530, 0.0
    %1619 = vadd.xlane.f32.xlu0 %v1618
    %v1620 = vpop.xlane.xlu0 %1619
    %v1621 = vsel %vm429, %v1531, 0.0
    %1622 = vadd.xlane.f32.xlu0 %v1621
    %v1623 = vpop.xlane.xlu0 %1622
    %v1624 = vsel %vm429, %v1532, 0.0
    %1625 = vadd.xlane.f32.xlu0 %v1624
    %v1626 = vpop.xlane.xlu0 %1625
    %v1627 = vsel %vm429, %v1533, 0.0
    %1628 = vadd.xlane.f32.xlu0 %v1627
    %v1629 = vpop.xlane.xlu0 %1628
    %v1630 = vsel %vm429, %v1534, 0.0
    %1631 = vadd.xlane.f32.xlu0 %v1630
    %v1632 = vpop.xlane.xlu0 %1631
    %v1633 = vsel %vm429, %v1535, 0.0
    %1634 = vadd.xlane.f32.xlu0 %v1633
    %v1635 = vpop.xlane.xlu0 %1634
    %v1636 = vsel %vm429, %v1536, 0.0
    %1637 = vadd.xlane.f32.xlu0 %v1636
    %v1638 = vpop.xlane.xlu0 %1637
    %v1639 = vsel %vm429, %v1537, 0.0
    %1640 = vadd.xlane.f32.xlu0 %v1639
    %v1641 = vpop.xlane.xlu0 %1640
    %v1642 = vsel %vm429, %v1538, 0.0
    %1643 = vadd.xlane.f32.xlu0 %v1642
    %v1644 = vpop.xlane.xlu0 %1643
    %v1645 = vsel %vm429, %v1539, 0.0
    %1646 = vadd.xlane.f32.xlu0 %v1645
    %v1647 = vpop.xlane.xlu0 %1646
    %v1648 = vsel %vm429, %v1540, 0.0
    %1649 = vadd.xlane.f32.xlu0 %v1648
    %v1650 = vpop.xlane.xlu0 %1649
    %v1651 = vsel %vm429, %v1541, 0.0
    %1652 = vadd.xlane.f32.xlu0 %v1651
    %v1653 = vpop.xlane.xlu0 %1652
    %v1654 = vsel %vm429, %v1542, 0.0
    %1655 = vadd.xlane.f32.xlu0 %v1654
    %v1656 = vpop.xlane.xlu0 %1655
    %v1657 = vsel %vm429, %v1543, 0.0
    %1658 = vadd.xlane.f32.xlu0 %v1657
    %v1659 = vpop.xlane.xlu0 %1658
    %v1660 = vsel %vm429, %v1544, 0.0
    %1661 = vadd.xlane.f32.xlu0 %v1660
    %v1662 = vpop.xlane.xlu0 %1661
    %v1663 = vsel %vm429, %v1545, 0.0
    %1664 = vadd.xlane.f32.xlu0 %v1663
    %v1665 = vpop.xlane.xlu0 %1664
    %v1666 = vsel %vm429, %v1546, 0.0
    %1667 = vadd.xlane.f32.xlu0 %v1666
    %v1668 = vpop.xlane.xlu0 %1667
    %v1669 = vsel %vm429, %v1547, 0.0
    %1670 = vadd.xlane.f32.xlu0 %v1669
    %v1671 = vpop.xlane.xlu0 %1670
    %v1672 = vsel %vm429, %v1548, 0.0
    %1673 = vadd.xlane.f32.xlu0 %v1672
    %v1674 = vpop.xlane.xlu0 %1673
    %v1675 = vsel %vm429, %v1549, 0.0
    %1676 = vadd.xlane.f32.xlu0 %v1675
    %v1677 = vpop.xlane.xlu0 %1676
    %v1678 = vsel %vm429, %v1550, 0.0
    %1679 = vadd.xlane.f32.xlu0 %v1678
    %v1680 = vpop.xlane.xlu0 %1679
    %v1681 = vsel %vm429, %v1551, 0.0
    %1682 = vadd.xlane.f32.xlu0 %v1681
    %v1683 = vpop.xlane.xlu0 %1682
    %v1684 = vsel %vm429, %v1552, 0.0
    %1685 = vadd.xlane.f32.xlu0 %v1684
    %v1686 = vpop.xlane.xlu0 %1685
    %v1687 = vsel %vm429, %v1553, 0.0
    %1688 = vadd.xlane.f32.xlu0 %v1687
    %v1689 = vpop.xlane.xlu0 %1688
    %v1690 = vsel %vm429, %v1554, 0.0
    %1691 = vadd.xlane.f32.xlu0 %v1690
    %v1692 = vpop.xlane.xlu0 %1691
    %v1693 = vsel %vm429, %v1555, 0.0
    %1694 = vadd.xlane.f32.xlu0 %v1693
    %v1695 = vpop.xlane.xlu0 %1694
    %v1696 = vsel %vm429, %v1556, 0.0
    %1697 = vadd.xlane.f32.xlu0 %v1696
    %v1698 = vpop.xlane.xlu0 %1697
    %v1699 = vsel %vm429, %v1557, 0.0
    %1700 = vadd.xlane.f32.xlu0 %v1699
    %v1701 = vpop.xlane.xlu0 %1700
    %v1702 = vsel %vm429, %v1558, 0.0
    %1703 = vadd.xlane.f32.xlu0 %v1702
    %v1704 = vpop.xlane.xlu0 %1703
    %v1705 = vsel %vm429, %v1559, 0.0
    %1706 = vadd.xlane.f32.xlu0 %v1705
    %v1707 = vpop.xlane.xlu0 %1706
    %v1708 = vsel %vm429, %v1560, 0.0
    %1709 = vadd.xlane.f32.xlu0 %v1708
    %v1710 = vpop.xlane.xlu0 %1709
    %v1711 = vsel %vm429, %v1561, 0.0
    %1712 = vadd.xlane.f32.xlu0 %v1711
    %v1713 = vpop.xlane.xlu0 %1712
    %v1714 = vsel %vm429, %v1562, 0.0
    %1715 = vadd.xlane.f32.xlu0 %v1714
    %v1716 = vpop.xlane.xlu0 %1715
    %v1717 = vsel %vm429, %v1563, 0.0
    %1718 = vadd.xlane.f32.xlu0 %v1717
    %v1719 = vpop.xlane.xlu0 %1718
    %v1720 = vsel %vm429, %v1564, 0.0
    %1721 = vadd.xlane.f32.xlu0 %v1720
    %v1722 = vpop.xlane.xlu0 %1721
    %v1723 = vsel %vm429, %v1565, 0.0
    %1724 = vadd.xlane.f32.xlu0 %v1723
    %v1725 = vpop.xlane.xlu0 %1724
    %v1726 = vsel %vm429, %v1566, 0.0
    %1727 = vadd.xlane.f32.xlu0 %v1726
    %v1728 = vpop.xlane.xlu0 %1727
    %v1729 = vsel %vm429, %v1567, 0.0
    %1730 = vadd.xlane.f32.xlu0 %v1729
    %v1731 = vpop.xlane.xlu0 %1730
    %v1732 = vsel %vm429, %v1568, 0.0
    %1733 = vadd.xlane.f32.xlu0 %v1732
    %v1734 = vpop.xlane.xlu0 %1733
    %v1735 = vsel %vm429, %v1569, 0.0
    %1736 = vadd.xlane.f32.xlu0 %v1735
    %v1737 = vpop.xlane.xlu0 %1736
    %v1738 = vsel %vm429, %v1570, 0.0
    %1739 = vadd.xlane.f32.xlu0 %v1738
    %v1740 = vpop.xlane.xlu0 %1739
    %v1741 = vsel %vm429, %v1571, 0.0
    %1742 = vadd.xlane.f32.xlu0 %v1741
    %v1743 = vpop.xlane.xlu0 %1742
    %v1744 = vsel %vm429, %v1572, 0.0
    %1745 = vadd.xlane.f32.xlu0 %v1744
    %v1746 = vpop.xlane.xlu0 %1745
    %v1747 = vsel %vm429, %v1573, 0.0
    %1748 = vadd.xlane.f32.xlu0 %v1747
    %v1749 = vpop.xlane.xlu0 %1748
    %v1750 = vsel %vm429, %v1574, 0.0
    %1751 = vadd.xlane.f32.xlu0 %v1750
    %v1752 = vpop.xlane.xlu0 %1751
    %v1753 = vsel %vm429, %v1575, 0.0
    %1754 = vadd.xlane.f32.xlu0 %v1753
    %v1755 = vpop.xlane.xlu0 %1754
    %v1756 = vsel %vm429, %v1576, 0.0
    %1757 = vadd.xlane.f32.xlu0 %v1756
    %v1758 = vpop.xlane.xlu0 %1757
    %v1759 = vsel %vm429, %v1577, 0.0
    %1760 = vadd.xlane.f32.xlu0 %v1759
    %v1761 = vpop.xlane.xlu0 %1760
    %v1762 = vsel %vm429, %v1578, 0.0
    %1763 = vadd.xlane.f32.xlu0 %v1762
    %v1764 = vpop.xlane.xlu0 %1763
    %v1765 = vsel %vm429, %v1579, 0.0
    %1766 = vadd.xlane.f32.xlu0 %v1765
    %v1767 = vpop.xlane.xlu0 %1766
    %v1768 = vsel %vm429, %v1580, 0.0
    %1769 = vadd.xlane.f32.xlu0 %v1768
    %v1770 = vpop.xlane.xlu0 %1769
    %v1771 = vsel %vm429, %v1581, 0.0
    %1772 = vadd.xlane.f32.xlu0 %v1771
    %v1773 = vpop.xlane.xlu0 %1772
    %v1774 = vsel %vm429, %v1582, 0.0
    %1775 = vadd.xlane.f32.xlu0 %v1774
    %v1776 = vpop.xlane.xlu0 %1775
    %v1777 = vsel %vm429, %v1583, 0.0
    %1778 = vadd.xlane.f32.xlu0 %v1777
    %v1779 = vpop.xlane.xlu0 %1778
    %v1780 = vsel %vm429, %v1584, 0.0
    %1781 = vadd.xlane.f32.xlu0 %v1780
    %v1782 = vpop.xlane.xlu0 %1781
    %v1783 = vsel %vm429, %v1585, 0.0
    %1784 = vadd.xlane.f32.xlu0 %v1783
    %v1785 = vpop.xlane.xlu0 %1784
    %v1786 = vsel %vm429, %v1586, 0.0
    %1787 = vadd.xlane.f32.xlu0 %v1786
    %v1788 = vpop.xlane.xlu0 %1787
    %v1789 = vsel %vm429, %v1587, 0.0
    %1790 = vadd.xlane.f32.xlu0 %v1789
    %v1791 = vpop.xlane.xlu0 %1790
    %v1792 = vsub.f32 %v1178, %v1590
    %v1793 = vsub.f32 %v1179, %v1593
    %v1794 = vsub.f32 %v1180, %v1596
    %v1795 = vsub.f32 %v1181, %v1599
    %v1796 = vsub.f32 %v1182, %v1602
    %v1797 = vsub.f32 %v1183, %v1605
    %v1798 = vsub.f32 %v1184, %v1608
    %v1799 = vsub.f32 %v1185, %v1611
    %v1800 = vsub.f32 %v1186, %v1614
    %v1801 = vsub.f32 %v1187, %v1617
    %v1802 = vsub.f32 %v1188, %v1620
    %v1803 = vsub.f32 %v1189, %v1623
    %v1804 = vsub.f32 %v1190, %v1626
    %v1805 = vsub.f32 %v1191, %v1629
    %v1806 = vsub.f32 %v1192, %v1632
    %v1807 = vsub.f32 %v1193, %v1635
    %v1808 = vsub.f32 %v1194, %v1638
    %v1809 = vsub.f32 %v1195, %v1641
    %v1810 = vsub.f32 %v1196, %v1644
    %v1811 = vsub.f32 %v1197, %v1647
    %v1812 = vsub.f32 %v1198, %v1650
    %v1813 = vsub.f32 %v1199, %v1653
    %v1814 = vsub.f32 %v1200, %v1656
    %v1815 = vsub.f32 %v1201, %v1659
    %v1816 = vsub.f32 %v1202, %v1662
    %v1817 = vsub.f32 %v1203, %v1665
    %v1818 = vsub.f32 %v1204, %v1668
    %v1819 = vsub.f32 %v1205, %v1671
    %v1820 = vsub.f32 %v1206, %v1674
    %v1821 = vsub.f32 %v1207, %v1677
    %v1822 = vsub.f32 %v1208, %v1680
    %v1823 = vsub.f32 %v1209, %v1683
    %v1824 = vsub.f32 %v1210, %v1686
    %v1825 = vsub.f32 %v1211, %v1689
    %v1826 = vsub.f32 %v1212, %v1692
    %v1827 = vsub.f32 %v1213, %v1695
    %v1828 = vsub.f32 %v1214, %v1698
    %v1829 = vsub.f32 %v1215, %v1701
    %v1830 = vsub.f32 %v1216, %v1704
    %v1831 = vsub.f32 %v1217, %v1707
    %v1832 = vsub.f32 %v1218, %v1710
    %v1833 = vsub.f32 %v1219, %v1713
    %v1834 = vsub.f32 %v1220, %v1716
    %v1835 = vsub.f32 %v1221, %v1719
    %v1836 = vsub.f32 %v1222, %v1722
    %v1837 = vsub.f32 %v1223, %v1725
    %v1838 = vsub.f32 %v1224, %v1728
    %v1839 = vsub.f32 %v1225, %v1731
    %v1840 = vsub.f32 %v1226, %v1734
    %v1841 = vsub.f32 %v1227, %v1737
    %v1842 = vsub.f32 %v1228, %v1740
    %v1843 = vsub.f32 %v1229, %v1743
    %v1844 = vsub.f32 %v1230, %v1746
    %v1845 = vsub.f32 %v1231, %v1749
    %v1846 = vsub.f32 %v1232, %v1752
    %v1847 = vsub.f32 %v1233, %v1755
    %v1848 = vsub.f32 %v1234, %v1758
    %v1849 = vsub.f32 %v1235, %v1761
    %v1850 = vsub.f32 %v1236, %v1764
    %v1851 = vsub.f32 %v1237, %v1767
    %v1852 = vsub.f32 %v1238, %v1770
    %v1853 = vsub.f32 %v1239, %v1773
    %v1854 = vsub.f32 %v1240, %v1776
    %v1855 = vsub.f32 %v1241, %v1779
    %v1856 = vsub.f32 %v1242, %v1782
    %v1857 = vsub.f32 %v1243, %v1785
    %v1858 = vsub.f32 %v1244, %v1788
    %v1859 = vsub.f32 %v1245, %v1791
    %s1860 = smul.u32 0, 544
    %v1861 = vlaneseq
    %v1862 = vshrl.u32 %v1861, 7
    %v1863 = vadd.s32 %v1862, 8
    %v1864 = vadd.s32 %v1862, 16
    %v1865 = vadd.s32 %v1862, 24
    %v1866 = vadd.s32 %v1862, 32
    %v1867 = vadd.s32 %v1862, 40
    %v1868 = vadd.s32 %v1862, 48
    %v1869 = vadd.s32 %v1862, 56
    %v1870 = vadd.s32 %v1862, 64
    %v1871 = vadd.s32 %v1862, 72
    %v1872 = vadd.s32 %v1862, 80
    %v1873 = vadd.s32 %v1862, 88
    %v1874 = vadd.s32 %v1862, 96
    %v1875 = vadd.s32 %v1862, 104
    %v1876 = vadd.s32 %v1862, 112
    %v1877 = vadd.s32 %v1862, 120
    %v1878 = vadd.s32 %v1862, 128
    %v1879 = vadd.s32 %v1862, 136
    %v1880 = vadd.s32 %v1862, 144
    %v1881 = vadd.s32 %v1862, 152
    %v1882 = vadd.s32 %v1862, 160
    %v1883 = vadd.s32 %v1862, 168
    %v1884 = vadd.s32 %v1862, 176
    %v1885 = vadd.s32 %v1862, 184
    %v1886 = vadd.s32 %v1862, 192
    %v1887 = vadd.s32 %v1862, 200
    %v1888 = vadd.s32 %v1862, 208
    %v1889 = vadd.s32 %v1862, 216
    %v1890 = vadd.s32 %v1862, 224
    %v1891 = vadd.s32 %v1862, 232
    %v1892 = vadd.s32 %v1862, 240
    %v1893 = vadd.s32 %v1862, 248
    %v1894 = vadd.s32 %v1862, 256
    %v1895 = vadd.s32 %v1862, 264
    %v1896 = vadd.s32 %v1862, 272
    %v1897 = vadd.s32 %v1862, 280
    %v1898 = vadd.s32 %v1862, 288
    %v1899 = vadd.s32 %v1862, 296
    %v1900 = vadd.s32 %v1862, 304
    %v1901 = vadd.s32 %v1862, 312
    %v1902 = vadd.s32 %v1862, 320
    %v1903 = vadd.s32 %v1862, 328
    %v1904 = vadd.s32 %v1862, 336
    %v1905 = vadd.s32 %v1862, 344
    %v1906 = vadd.s32 %v1862, 352
    %v1907 = vadd.s32 %v1862, 360
    %v1908 = vadd.s32 %v1862, 368
    %v1909 = vadd.s32 %v1862, 376
    %v1910 = vadd.s32 %v1862, 384
    %v1911 = vadd.s32 %v1862, 392
    %v1912 = vadd.s32 %v1862, 400
    %v1913 = vadd.s32 %v1862, 408
    %v1914 = vadd.s32 %v1862, 416
    %v1915 = vadd.s32 %v1862, 424
    %v1916 = vadd.s32 %v1862, 432
    %v1917 = vadd.s32 %v1862, 440
    %v1918 = vadd.s32 %v1862, 448
    %v1919 = vadd.s32 %v1862, 456
    %v1920 = vadd.s32 %v1862, 464
    %v1921 = vadd.s32 %v1862, 472
    %v1922 = vadd.s32 %v1862, 480
    %v1923 = vadd.s32 %v1862, 488
    %v1924 = vadd.s32 %v1862, 496
    %v1925 = vadd.s32 %v1862, 504
    %v1926 = vadd.s32 %v1862, 512
    %v1927 = vadd.s32 %v1862, 520
    %v1928 = vadd.s32 %v1862, 528
    %v1929 = vadd.s32 %v1862, 536
    %v1930 = vstv %s1860
    %v1931 = vadd.s32 %v1930, %v1862
    %v1932 = vadd.s32 %v1930, %v1863
    %v1933 = vadd.s32 %v1930, %v1864
    %v1934 = vadd.s32 %v1930, %v1865
    %v1935 = vadd.s32 %v1930, %v1866
    %v1936 = vadd.s32 %v1930, %v1867
    %v1937 = vadd.s32 %v1930, %v1868
    %v1938 = vadd.s32 %v1930, %v1869
    %v1939 = vadd.s32 %v1930, %v1870
    %v1940 = vadd.s32 %v1930, %v1871
    %v1941 = vadd.s32 %v1930, %v1872
    %v1942 = vadd.s32 %v1930, %v1873
    %v1943 = vadd.s32 %v1930, %v1874
    %v1944 = vadd.s32 %v1930, %v1875
    %v1945 = vadd.s32 %v1930, %v1876
    %v1946 = vadd.s32 %v1930, %v1877
    %v1947 = vadd.s32 %v1930, %v1878
    %v1948 = vadd.s32 %v1930, %v1879
    %v1949 = vadd.s32 %v1930, %v1880
    %v1950 = vadd.s32 %v1930, %v1881
    %v1951 = vadd.s32 %v1930, %v1882
    %v1952 = vadd.s32 %v1930, %v1883
    %v1953 = vadd.s32 %v1930, %v1884
    %v1954 = vadd.s32 %v1930, %v1885
    %v1955 = vadd.s32 %v1930, %v1886
    %v1956 = vadd.s32 %v1930, %v1887
    %v1957 = vadd.s32 %v1930, %v1888
    %v1958 = vadd.s32 %v1930, %v1889
    %v1959 = vadd.s32 %v1930, %v1890
    %v1960 = vadd.s32 %v1930, %v1891
    %v1961 = vadd.s32 %v1930, %v1892
    %v1962 = vadd.s32 %v1930, %v1893
    %v1963 = vadd.s32 %v1930, %v1894
    %v1964 = vadd.s32 %v1930, %v1895
    %v1965 = vadd.s32 %v1930, %v1896
    %v1966 = vadd.s32 %v1930, %v1897
    %v1967 = vadd.s32 %v1930, %v1898
    %v1968 = vadd.s32 %v1930, %v1899
    %v1969 = vadd.s32 %v1930, %v1900
    %v1970 = vadd.s32 %v1930, %v1901
    %v1971 = vadd.s32 %v1930, %v1902
    %v1972 = vadd.s32 %v1930, %v1903
    %v1973 = vadd.s32 %v1930, %v1904
    %v1974 = vadd.s32 %v1930, %v1905
    %v1975 = vadd.s32 %v1930, %v1906
    %v1976 = vadd.s32 %v1930, %v1907
    %v1977 = vadd.s32 %v1930, %v1908
    %v1978 = vadd.s32 %v1930, %v1909
    %v1979 = vadd.s32 %v1930, %v1910
    %v1980 = vadd.s32 %v1930, %v1911
    %v1981 = vadd.s32 %v1930, %v1912
    %v1982 = vadd.s32 %v1930, %v1913
    %v1983 = vadd.s32 %v1930, %v1914
    %v1984 = vadd.s32 %v1930, %v1915
    %v1985 = vadd.s32 %v1930, %v1916
    %v1986 = vadd.s32 %v1930, %v1917
    %v1987 = vadd.s32 %v1930, %v1918
    %v1988 = vadd.s32 %v1930, %v1919
    %v1989 = vadd.s32 %v1930, %v1920
    %v1990 = vadd.s32 %v1930, %v1921
    %v1991 = vadd.s32 %v1930, %v1922
    %v1992 = vadd.s32 %v1930, %v1923
    %v1993 = vadd.s32 %v1930, %v1924
    %v1994 = vadd.s32 %v1930, %v1925
    %v1995 = vadd.s32 %v1930, %v1926
    %v1996 = vadd.s32 %v1930, %v1927
    %v1997 = vadd.s32 %v1930, %v1928
    %v1998 = vadd.s32 %v1930, %v1929
    %vm1999 = vcmp.lt.s32.totalorder %v1931, 520
    %vm2000 = vcmp.lt.s32.totalorder %v1932, 520
    %vm2001 = vcmp.lt.s32.totalorder %v1933, 520
    %vm2002 = vcmp.lt.s32.totalorder %v1934, 520
    %vm2003 = vcmp.lt.s32.totalorder %v1935, 520
    %vm2004 = vcmp.lt.s32.totalorder %v1936, 520
    %vm2005 = vcmp.lt.s32.totalorder %v1937, 520
    %vm2006 = vcmp.lt.s32.totalorder %v1938, 520
    %vm2007 = vcmp.lt.s32.totalorder %v1939, 520
    %vm2008 = vcmp.lt.s32.totalorder %v1940, 520
    %vm2009 = vcmp.lt.s32.totalorder %v1941, 520
    %vm2010 = vcmp.lt.s32.totalorder %v1942, 520
    %vm2011 = vcmp.lt.s32.totalorder %v1943, 520
    %vm2012 = vcmp.lt.s32.totalorder %v1944, 520
    %vm2013 = vcmp.lt.s32.totalorder %v1945, 520
    %vm2014 = vcmp.lt.s32.totalorder %v1946, 520
    %vm2015 = vcmp.lt.s32.totalorder %v1947, 520
    %vm2016 = vcmp.lt.s32.totalorder %v1948, 520
    %vm2017 = vcmp.lt.s32.totalorder %v1949, 520
    %vm2018 = vcmp.lt.s32.totalorder %v1950, 520
    %vm2019 = vcmp.lt.s32.totalorder %v1951, 520
    %vm2020 = vcmp.lt.s32.totalorder %v1952, 520
    %vm2021 = vcmp.lt.s32.totalorder %v1953, 520
    %vm2022 = vcmp.lt.s32.totalorder %v1954, 520
    %vm2023 = vcmp.lt.s32.totalorder %v1955, 520
    %vm2024 = vcmp.lt.s32.totalorder %v1956, 520
    %vm2025 = vcmp.lt.s32.totalorder %v1957, 520
    %vm2026 = vcmp.lt.s32.totalorder %v1958, 520
    %vm2027 = vcmp.lt.s32.totalorder %v1959, 520
    %vm2028 = vcmp.lt.s32.totalorder %v1960, 520
    %vm2029 = vcmp.lt.s32.totalorder %v1961, 520
    %vm2030 = vcmp.lt.s32.totalorder %v1962, 520
    %vm2031 = vcmp.lt.s32.totalorder %v1963, 520
    %vm2032 = vcmp.lt.s32.totalorder %v1964, 520
    %vm2033 = vcmp.lt.s32.totalorder %v1965, 520
    %vm2034 = vcmp.lt.s32.totalorder %v1966, 520
    %vm2035 = vcmp.lt.s32.totalorder %v1967, 520
    %vm2036 = vcmp.lt.s32.totalorder %v1968, 520
    %vm2037 = vcmp.lt.s32.totalorder %v1969, 520
    %vm2038 = vcmp.lt.s32.totalorder %v1970, 520
    %vm2039 = vcmp.lt.s32.totalorder %v1971, 520
    %vm2040 = vcmp.lt.s32.totalorder %v1972, 520
    %vm2041 = vcmp.lt.s32.totalorder %v1973, 520
    %vm2042 = vcmp.lt.s32.totalorder %v1974, 520
    %vm2043 = vcmp.lt.s32.totalorder %v1975, 520
    %vm2044 = vcmp.lt.s32.totalorder %v1976, 520
    %vm2045 = vcmp.lt.s32.totalorder %v1977, 520
    %vm2046 = vcmp.lt.s32.totalorder %v1978, 520
    %vm2047 = vcmp.lt.s32.totalorder %v1979, 520
    %vm2048 = vcmp.lt.s32.totalorder %v1980, 520
    %vm2049 = vcmp.lt.s32.totalorder %v1981, 520
    %vm2050 = vcmp.lt.s32.totalorder %v1982, 520
    %vm2051 = vcmp.lt.s32.totalorder %v1983, 520
    %vm2052 = vcmp.lt.s32.totalorder %v1984, 520
    %vm2053 = vcmp.lt.s32.totalorder %v1985, 520
    %vm2054 = vcmp.lt.s32.totalorder %v1986, 520
    %vm2055 = vcmp.lt.s32.totalorder %v1987, 520
    %vm2056 = vcmp.lt.s32.totalorder %v1988, 520
    %vm2057 = vcmp.lt.s32.totalorder %v1989, 520
    %vm2058 = vcmp.lt.s32.totalorder %v1990, 520
    %vm2059 = vcmp.lt.s32.totalorder %v1991, 520
    %vm2060 = vcmp.lt.s32.totalorder %v1992, 520
    %vm2061 = vcmp.lt.s32.totalorder %v1993, 520
    %vm2062 = vcmp.lt.s32.totalorder %v1994, 520
    %vm2063 = vcmp.lt.s32.totalorder %v1995, 520
    %vm2064 = vcmp.lt.s32.totalorder %v1996, 520
    %vm2065 = vcmp.lt.s32.totalorder %v1997, 520
    %vm2066 = vcmp.lt.s32.totalorder %v1998, 520
    %v2067 = vsel %vm1999, %v1792, 0.0
    %v2068 = vsel %vm2000, %v1793, 0.0
    %v2069 = vsel %vm2001, %v1794, 0.0
    %v2070 = vsel %vm2002, %v1795, 0.0
    %v2071 = vsel %vm2003, %v1796, 0.0
    %v2072 = vsel %vm2004, %v1797, 0.0
    %v2073 = vsel %vm2005, %v1798, 0.0
    %v2074 = vsel %vm2006, %v1799, 0.0
    %v2075 = vsel %vm2007, %v1800, 0.0
    %v2076 = vsel %vm2008, %v1801, 0.0
    %v2077 = vsel %vm2009, %v1802, 0.0
    %v2078 = vsel %vm2010, %v1803, 0.0
    %v2079 = vsel %vm2011, %v1804, 0.0
    %v2080 = vsel %vm2012, %v1805, 0.0
    %v2081 = vsel %vm2013, %v1806, 0.0
    %v2082 = vsel %vm2014, %v1807, 0.0
    %v2083 = vsel %vm2015, %v1808, 0.0
    %v2084 = vsel %vm2016, %v1809, 0.0
    %v2085 = vsel %vm2017, %v1810, 0.0
    %v2086 = vsel %vm2018, %v1811, 0.0
    %v2087 = vsel %vm2019, %v1812, 0.0
    %v2088 = vsel %vm2020, %v1813, 0.0
    %v2089 = vsel %vm2021, %v1814, 0.0
    %v2090 = vsel %vm2022, %v1815, 0.0
    %v2091 = vsel %vm2023, %v1816, 0.0
    %v2092 = vsel %vm2024, %v1817, 0.0
    %v2093 = vsel %vm2025, %v1818, 0.0
    %v2094 = vsel %vm2026, %v1819, 0.0
    %v2095 = vsel %vm2027, %v1820, 0.0
    %v2096 = vsel %vm2028, %v1821, 0.0
    %v2097 = vsel %vm2029, %v1822, 0.0
    %v2098 = vsel %vm2030, %v1823, 0.0
    %v2099 = vsel %vm2031, %v1824, 0.0
    %v2100 = vsel %vm2032, %v1825, 0.0
    %v2101 = vsel %vm2033, %v1826, 0.0
    %v2102 = vsel %vm2034, %v1827, 0.0
    %v2103 = vsel %vm2035, %v1828, 0.0
    %v2104 = vsel %vm2036, %v1829, 0.0
    %v2105 = vsel %vm2037, %v1830, 0.0
    %v2106 = vsel %vm2038, %v1831, 0.0
    %v2107 = vsel %vm2039, %v1832, 0.0
    %v2108 = vsel %vm2040, %v1833, 0.0
    %v2109 = vsel %vm2041, %v1834, 0.0
    %v2110 = vsel %vm2042, %v1835, 0.0
    %v2111 = vsel %vm2043, %v1836, 0.0
    %v2112 = vsel %vm2044, %v1837, 0.0
    %v2113 = vsel %vm2045, %v1838, 0.0
    %v2114 = vsel %vm2046, %v1839, 0.0
    %v2115 = vsel %vm2047, %v1840, 0.0
    %v2116 = vsel %vm2048, %v1841, 0.0
    %v2117 = vsel %vm2049, %v1842, 0.0
    %v2118 = vsel %vm2050, %v1843, 0.0
    %v2119 = vsel %vm2051, %v1844, 0.0
    %v2120 = vsel %vm2052, %v1845, 0.0
    %v2121 = vsel %vm2053, %v1846, 0.0
    %v2122 = vsel %vm2054, %v1847, 0.0
    %v2123 = vsel %vm2055, %v1848, 0.0
    %v2124 = vsel %vm2056, %v1849, 0.0
    %v2125 = vsel %vm2057, %v1850, 0.0
    %v2126 = vsel %vm2058, %v1851, 0.0
    %v2127 = vsel %vm2059, %v1852, 0.0
    %v2128 = vsel %vm2060, %v1853, 0.0
    %v2129 = vsel %vm2061, %v1854, 0.0
    %v2130 = vsel %vm2062, %v1855, 0.0
    %v2131 = vsel %vm2063, %v1856, 0.0
    %v2132 = vsel %vm2064, %v1857, 0.0
    %v2133 = vsel %vm2065, %v1858, 0.0
    %v2134 = vsel %vm2066, %v1859, 0.0
    %v2135 = vld [vmem:[#allocation2] sm:$0x1]
    %vm2136 = vcmask 7168
    %v2137 = vsel %vm2136, %v2067, 0.0
    %v2138 = vsel %vm2136, %v2068, 0.0
    %v2139 = vadd.f32 %v2137, %v2138
    %v2140 = vsel %vm2136, %v2069, 0.0
    %v2141 = vadd.f32 %v2139, %v2140
    %v2142 = vsel %vm2136, %v2070, 0.0
    %v2143 = vadd.f32 %v2141, %v2142
    %v2144 = vsel %vm2136, %v2071, 0.0
    %v2145 = vadd.f32 %v2143, %v2144
    %v2146 = vsel %vm2136, %v2072, 0.0
    %v2147 = vadd.f32 %v2145, %v2146
    %v2148 = vsel %vm2136, %v2073, 0.0
    %v2149 = vadd.f32 %v2147, %v2148
    %v2150 = vsel %vm2136, %v2074, 0.0
    %v2151 = vadd.f32 %v2149, %v2150
    %v2152 = vsel %vm2136, %v2075, 0.0
    %v2153 = vadd.f32 %v2151, %v2152
    %v2154 = vsel %vm2136, %v2076, 0.0
    %v2155 = vadd.f32 %v2153, %v2154
    %v2156 = vsel %vm2136, %v2077, 0.0
    %v2157 = vadd.f32 %v2155, %v2156
    %v2158 = vsel %vm2136, %v2078, 0.0
    %v2159 = vadd.f32 %v2157, %v2158
    %v2160 = vsel %vm2136, %v2079, 0.0
    %v2161 = vadd.f32 %v2159, %v2160
    %v2162 = vsel %vm2136, %v2080, 0.0
    %v2163 = vadd.f32 %v2161, %v2162
    %v2164 = vsel %vm2136, %v2081, 0.0
    %v2165 = vadd.f32 %v2163, %v2164
    %v2166 = vsel %vm2136, %v2082, 0.0
    %v2167 = vadd.f32 %v2165, %v2166
    %v2168 = vsel %vm2136, %v2083, 0.0
    %v2169 = vadd.f32 %v2167, %v2168
    %v2170 = vsel %vm2136, %v2084, 0.0
    %v2171 = vadd.f32 %v2169, %v2170
    %v2172 = vsel %vm2136, %v2085, 0.0
    %v2173 = vadd.f32 %v2171, %v2172
    %v2174 = vsel %vm2136, %v2086, 0.0
    %v2175 = vadd.f32 %v2173, %v2174
    %v2176 = vsel %vm2136, %v2087, 0.0
    %v2177 = vadd.f32 %v2175, %v2176
    %v2178 = vsel %vm2136, %v2088, 0.0
    %v2179 = vadd.f32 %v2177, %v2178
    %v2180 = vsel %vm2136, %v2089, 0.0
    %v2181 = vadd.f32 %v2179, %v2180
    %v2182 = vsel %vm2136, %v2090, 0.0
    %v2183 = vadd.f32 %v2181, %v2182
    %v2184 = vsel %vm2136, %v2091, 0.0
    %v2185 = vadd.f32 %v2183, %v2184
    %v2186 = vsel %vm2136, %v2092, 0.0
    %v2187 = vadd.f32 %v2185, %v2186
    %v2188 = vsel %vm2136, %v2093, 0.0
    %v2189 = vadd.f32 %v2187, %v2188
    %v2190 = vsel %vm2136, %v2094, 0.0
    %v2191 = vadd.f32 %v2189, %v2190
    %v2192 = vsel %vm2136, %v2095, 0.0
    %v2193 = vadd.f32 %v2191, %v2192
    %v2194 = vsel %vm2136, %v2096, 0.0
    %v2195 = vadd.f32 %v2193, %v2194
    %v2196 = vsel %vm2136, %v2097, 0.0
    %v2197 = vadd.f32 %v2195, %v2196
    %v2198 = vsel %vm2136, %v2098, 0.0
    %v2199 = vadd.f32 %v2197, %v2198
    %v2200 = vsel %vm2136, %v2099, 0.0
    %v2201 = vadd.f32 %v2199, %v2200
    %v2202 = vsel %vm2136, %v2100, 0.0
    %v2203 = vadd.f32 %v2201, %v2202
    %v2204 = vsel %vm2136, %v2101, 0.0
    %v2205 = vadd.f32 %v2203, %v2204
    %v2206 = vsel %vm2136, %v2102, 0.0
    %v2207 = vadd.f32 %v2205, %v2206
    %v2208 = vsel %vm2136, %v2103, 0.0
    %v2209 = vadd.f32 %v2207, %v2208
    %v2210 = vsel %vm2136, %v2104, 0.0
    %v2211 = vadd.f32 %v2209, %v2210
    %v2212 = vsel %vm2136, %v2105, 0.0
    %v2213 = vadd.f32 %v2211, %v2212
    %v2214 = vsel %vm2136, %v2106, 0.0
    %v2215 = vadd.f32 %v2213, %v2214
    %v2216 = vsel %vm2136, %v2107, 0.0
    %v2217 = vadd.f32 %v2215, %v2216
    %v2218 = vsel %vm2136, %v2108, 0.0
    %v2219 = vadd.f32 %v2217, %v2218
    %v2220 = vsel %vm2136, %v2109, 0.0
    %v2221 = vadd.f32 %v2219, %v2220
    %v2222 = vsel %vm2136, %v2110, 0.0
    %v2223 = vadd.f32 %v2221, %v2222
    %v2224 = vsel %vm2136, %v2111, 0.0
    %v2225 = vadd.f32 %v2223, %v2224
    %v2226 = vsel %vm2136, %v2112, 0.0
    %v2227 = vadd.f32 %v2225, %v2226
    %v2228 = vsel %vm2136, %v2113, 0.0
    %v2229 = vadd.f32 %v2227, %v2228
    %v2230 = vsel %vm2136, %v2114, 0.0
    %v2231 = vadd.f32 %v2229, %v2230
    %v2232 = vsel %vm2136, %v2115, 0.0
    %v2233 = vadd.f32 %v2231, %v2232
    %v2234 = vsel %vm2136, %v2116, 0.0
    %v2235 = vadd.f32 %v2233, %v2234
    %v2236 = vsel %vm2136, %v2117, 0.0
    %v2237 = vadd.f32 %v2235, %v2236
    %v2238 = vsel %vm2136, %v2118, 0.0
    %v2239 = vadd.f32 %v2237, %v2238
    %v2240 = vsel %vm2136, %v2119, 0.0
    %v2241 = vadd.f32 %v2239, %v2240
    %v2242 = vsel %vm2136, %v2120, 0.0
    %v2243 = vadd.f32 %v2241, %v2242
    %v2244 = vsel %vm2136, %v2121, 0.0
    %v2245 = vadd.f32 %v2243, %v2244
    %v2246 = vsel %vm2136, %v2122, 0.0
    %v2247 = vadd.f32 %v2245, %v2246
    %v2248 = vsel %vm2136, %v2123, 0.0
    %v2249 = vadd.f32 %v2247, %v2248
    %v2250 = vsel %vm2136, %v2124, 0.0
    %v2251 = vadd.f32 %v2249, %v2250
    %v2252 = vsel %vm2136, %v2125, 0.0
    %v2253 = vadd.f32 %v2251, %v2252
    %v2254 = vsel %vm2136, %v2126, 0.0
    %v2255 = vadd.f32 %v2253, %v2254
    %v2256 = vsel %vm2136, %v2127, 0.0
    %v2257 = vadd.f32 %v2255, %v2256
    %v2258 = vsel %vm2136, %v2128, 0.0
    %v2259 = vadd.f32 %v2257, %v2258
    %v2260 = vsel %vm2136, %v2129, 0.0
    %v2261 = vadd.f32 %v2259, %v2260
    %v2262 = vsel %vm2136, %v2130, 0.0
    %v2263 = vadd.f32 %v2261, %v2262
    %v2264 = vsel %vm2136, %v2131, 0.0
    %v2265 = vadd.f32 %v2263, %v2264
    %v2266 = vsel %vm2136, %v2132, 0.0
    %v2267 = vadd.f32 %v2265, %v2266
    %v2268 = vsel %vm2136, %v2133, 0.0
    %v2269 = vadd.f32 %v2267, %v2268
    %v2270 = vsel %vm2136, %v2134, 0.0
    %v2271 = vadd.f32 %v2269, %v2270
    %2272 = vadd.xlane.f32.xlu0 %v2271
    %v2273 = vpop.xlane.xlu0 %2272
    %v2274 = vrot.slane %v2273, 4
    %v2275 = vadd.f32 %v2273, %v2274
    %v2276 = vrot.slane %v2275, 2
    %v2277 = vadd.f32 %v2275, %v2276
    %v2278 = vrot.slane %v2277, 1
    %v2279 = vadd.f32 %v2277, %v2278
    %s2280 = vtos %v2279
    %v2281 = vstv %s2280
    %v2282 = vadd.f32 %v2135, %v2281
    %vm2283 = vcmask 0
    %2284 = vst.msk [vmem:[#allocation2] sm:$0x1] %vm2283, %v2282
    // Predicated region
    $region18: #{tpu_custom_call.1} parent=1 // pred_check
      %p2285 = pneg %p15
    $region19: #{tpu_custom_call.1} parent=1 // pred_check_branch
      %2287 = sbr.rel (%p2285) target = $region21
    $region20: #{tpu_custom_call.1} parent=1 // pred_region
      %v2288 = vld [vmem:[#allocation2] sm:$0x1]
      %v2289 = vmul.f32 %v2288, 0.0019230769
      %2290 = vst.msk [vmem:[#allocation3] sm:$0x1] %vm2283, %v2289
    $region21: #{tpu_custom_call.1} parent=1 // pred_fallthru
      _
    // Predicated region
    $region22: #{tpu_custom_call.1} parent=1 // pred_check
      _
    $region23: #{tpu_custom_call.1} parent=1 // pred_check_branch
      %2292 = sbr.rel (0) target = $region25
    $region24: #{tpu_custom_call.1} parent=1 // pred_region
      %s2294 = ssub.s32 16, 16
      %2295 = vsyncadd [#allocation4], %s2294
      %s2297 = sshll.u32 [#allocation3], 4
      %s2298 = int_to_ptr.vmem [resolvable:$true] %s2297
      %2300 = dma.vmem_to_hbm [thread:$0]  %s2298, 16, %s3, [#allocation4]
    $region25: #{tpu_custom_call.1} parent=1 // pred_fallthru
      _
    // Predicated region
    $region26: #{tpu_custom_call.1} parent=1 // pred_check
      _
    $region27: #{tpu_custom_call.1} parent=1 // pred_check_branch
      %2302 = sbr.rel (0) target = $region29
    $region28: #{tpu_custom_call.1} parent=1 // pred_region
      %2303 = dma.done [#allocation4], 16
    $region29: #{tpu_custom_call.1} parent=1 // pred_fallthru
      _
    %2304 = vsyncpa [#allocation4], 1

</llo_original>
